<compile_context>
chip_gen: v6e
topology: v6e:2x2x1
jax: 0.10.0
libtpu: 0.0.40
codegen_flags: <defaults>
</compile_context>

<pallas_src>
import math

import jax
import jax.numpy as jnp
import numpy as np
from jax.experimental import pallas as pl
from jax.experimental.pallas import tpu as pltpu

# ---------------- config (small, synthetic) ----------------
B = 2              # batch
S = 8              # sequence length
H = 32             # hidden size
NH = 4             # attention heads
DH = H // NH       # head dim
FF = 64            # FFN intermediate size
V = 100            # vocab size
BS = B * S         # flattened tokens
W3 = 3 * H         # packed vec-table width (>= FF, H, BS)
OUT_W = 128        # lane-dense output row width
INIT_RANGE = 0.02
LN_EPS = 1e-12
NEG_INF = -1e9


# ---------------- Pallas kernel: encoder layer + fc head, one invocation ----------------
def encoder_fc_kernel(
    x_ref,        # [BS, H]   flattened token activations
    wqkv_ref,     # [H, 3H]   fused QKV weights (1/sqrt(DH) folded into Q part)
    wo_ref,       # [H, H]
    w1_ref,       # [H, FF]
    w2_ref,       # [FF, H]
    vec_ref,      # [11, 3H]  packed small vectors, rows:
                  #   0: bqkv  1: b1  2: bo  3: ln1g  4: ln1b  5: b2
                  #   6: ln2g  7: ln2b  8: wfc row  9: bfc  10: key mask
    out_ref,      # [1, OUT_W] lane-dense output row (first BS lanes valid)
):
    f32 = jnp.float32
    x = x_ref[...]

    bqkv = vec_ref[0:1, :]            # [1, 3H]
    b1   = vec_ref[1:2, 0:FF]         # [1, FF]
    bo   = vec_ref[2:3, 0:H]
    ln1g = vec_ref[3:4, 0:H]
    ln1b = vec_ref[4:5, 0:H]
    b2   = vec_ref[5:6, 0:H]
    ln2g = vec_ref[6:7, 0:H]
    ln2b = vec_ref[7:8, 0:H]
    wfc  = vec_ref[8:9, 0:H]          # [1, H]
    bfc  = vec_ref[9:10, 0:1]         # [1, 1]
    km   = vec_ref[10:11, 0:BS]       # [1, BS] key mask (1.0 valid / 0.0 pad)

    def layernorm(a, g, b):
        mu = jnp.mean(a, axis=-1, keepdims=True)
        d = a - mu
        var = jnp.mean(d * d, axis=-1, keepdims=True)
        return d * jax.lax.rsqrt(var + LN_EPS) * g + b

    # ---- fused QKV projection (one matmul; scale folded into Q weights) ----
    qkv = jnp.dot(x, wqkv_ref[...], preferred_element_type=f32) + bqkv
    q = qkv[:, 0:H]
    k = qkv[:, H:2 * H]
    v = qkv[:, 2 * H:3 * H]

    # ---- flash-style per-(batch, head) attention: contraction over DH ----
    # No NH-replicated K/V, no block-diagonal ones matmul; key mask applied
    # directly to the scores of each [S, S] block (batches never mix).
    ctx_rows = []
    for b in range(B):                          # static unroll: B=2
        r0 = b * S
        km_b = km[:, r0:r0 + S]                 # [1, S]
        head_ctx = []
        for h in range(NH):                     # static unroll: NH=4
            c0 = h * DH
            qbh = q[r0:r0 + S, c0:c0 + DH]      # [S, DH] (already scaled)
            kbh = k[r0:r0 + S, c0:c0 + DH]
            vbh = v[r0:r0 + S, c0:c0 + DH]
            s_bh = jax.lax.dot_general(qbh, kbh, (((1,), (1,)), ((), ())),
                                       preferred_element_type=f32)      # [S, S]
            s_bh = jnp.where(km_b > 0.5, s_bh, NEG_INF)
            p = jnp.exp(s_bh - jnp.max(s_bh, axis=-1, keepdims=True))
            p = p / jnp.sum(p, axis=-1, keepdims=True)   # exact reciprocal
            head_ctx.append(jnp.dot(p, vbh, preferred_element_type=f32))  # [S, DH]
        ctx_rows.append(jnp.concatenate(head_ctx, axis=-1))               # [S, H]
    ctx = jnp.concatenate(ctx_rows, axis=0)                               # [BS, H]

    attn = jnp.dot(ctx, wo_ref[...], preferred_element_type=f32) + bo
    x1 = layernorm(x + attn, ln1g, ln1b)

    # ---- feed-forward ----
    h1 = jnp.dot(x1, w1_ref[...], preferred_element_type=f32) + b1
    h1 = jax.nn.gelu(h1, approximate=True)
    x2 = layernorm(x1 + jnp.dot(h1, w2_ref[...], preferred_element_type=f32) + b2,
                   ln2g, ln2b)

    # ---- fc head (Linear(H, 1)); fc_dropout is identity in eval ----
    # [1,H] x [BS,H]^T contraction -> [1, BS]; zero-pad to OUT_W lanes so the
    # final store is a single unmasked lane-dense vst.
    y = jax.lax.dot_general(wfc, x2, (((1,), (1,)), ((), ())),
                            preferred_element_type=f32) + bfc            # [1, BS]
    y_full = jnp.concatenate([y, jnp.zeros((1, OUT_W - BS), f32)], axis=-1)
    out_ref[...] = y_full.astype(out_ref.dtype)


# ---------------- wrapper ----------------
def custom_model_forward(x_emb, attn_mask, params):
    """x_emb: [B, S, H] f32 embeddings, attn_mask: [B, S, 1] f32. Returns [B, S, 1]."""
    (wq, bq, wk, bk, wv, bv, wo, bo,
     ln1g, ln1b, w1, b1, w2, b2, ln2g, ln2b, wfc, bfc) = params

    scale = 1.0 / math.sqrt(DH)
    # fused QKV with the attention scale folded into the Q projection
    w_qkv = jnp.concatenate([wq * scale, wk, wv], axis=1)            # [H, 3H]
    b_qkv = jnp.concatenate([bq * scale, bk, bv])                     # [3H]

    # pack ALL small vectors (biases, LN params, fc row/bias, key mask) into
    # one [11, 3H] table -> single DMA instead of many tiny refs.
    def row(vec):
        return jnp.zeros((W3,), jnp.float32).at[:vec.shape[0]].set(
            vec.astype(jnp.float32))

    keymask = (attn_mask.reshape(BS) > 0.5).astype(jnp.float32)       # [BS]
    vecs = jnp.stack([
        b_qkv,
        row(b1),
        row(bo), row(ln1g), row(ln1b), row(b2), row(ln2g), row(ln2b),
        row(wfc[:, 0]),
        row(bfc),
        row(keymask),
    ], axis=0)                                                        # [11, 3H]

    # NOTE: at real BERT sizes cast w_qkv/wo/w1/w2 and x to bf16 here for the
    # v6e/v7x MXU (keep f32 accumulation via preferred_element_type); toy f32 kept.
    vmem = pl.BlockSpec(memory_space=pltpu.MemorySpace.VMEM)
    out_row = pl.pallas_call(
        encoder_fc_kernel,
        out_shape=jax.ShapeDtypeStruct((1, OUT_W), jnp.float32),
        in_specs=[vmem] * 6,
        out_specs=vmem,
    )(x_emb.reshape(BS, H), w_qkv, wo, w1, w2, vecs)

    return out_row[:, :BS].reshape(B, S, 1)


# ---------------- pure-JAX reference (for correctness check) ----------------
def reference_forward(x_emb, attn_mask, params):
    (wq, bq, wk, bk, wv, bv, wo, bo,
     ln1g, ln1b, w1, b1, w2, b2, ln2g, ln2b, wfc, bfc) = params

    def ln(a, g, b):
        mu = jnp.mean(a, axis=-1, keepdims=True)
        var = jnp.mean((a - mu) ** 2, axis=-1, keepdims=True)
        return (a - mu) / jnp.sqrt(var + LN_EPS) * g + b

    x = x_emb
    q = x @ wq + bq
    k = x @ wk + bk
    v = x @ wv + bv
    qh = q.reshape(B, S, NH, DH).transpose(0, 2, 1, 3)
    kh = k.reshape(B, S, NH, DH).transpose(0, 2, 1, 3)
    vh = v.reshape(B, S, NH, DH).transpose(0, 2, 1, 3)
    s = jnp.einsum("bhqd,bhkd->bhqk", qh, kh) / math.sqrt(DH)
    s = s + (attn_mask[:, None, :, 0][:, :, None, :] - 1.0) * 1e9
    p = jax.nn.softmax(s, axis=-1)
    ctx = jnp.einsum("bhqk,bhkd->bhqd", p, vh).transpose(0, 2, 1, 3).reshape(B, S, H)
    x1 = ln(x + (ctx @ wo + bo), ln1g, ln1b)
    hdn = jax.nn.gelu(x1 @ w1 + b1, approximate=True)
    x2 = ln(x1 + (hdn @ w2 + b2), ln2g, ln2b)
    return x2 @ wfc + bfc


# ---------------- deterministic parameter init ----------------
def init_params(key):
    keys = jax.random.split(key, 12)
    nrm = lambda k, shp: (jax.random.normal(k, shp, jnp.float32) * INIT_RANGE)
    wq = nrm(keys[0], (H, H)); bq = jnp.zeros((H,), jnp.float32)
    wk = nrm(keys[1], (H, H)); bk = jnp.zeros((H,), jnp.float32)
    wv = nrm(keys[2], (H, H)); bv = jnp.zeros((H,), jnp.float32)
    wo = nrm(keys[3], (H, H)); bo = jnp.zeros((H,), jnp.float32)
    ln1g = jnp.ones((H,), jnp.float32); ln1b = jnp.zeros((H,), jnp.float32)
    w1 = nrm(keys[4], (H, FF)); b1 = jnp.zeros((FF,), jnp.float32)
    w2 = nrm(keys[5], (FF, H)); b2 = jnp.zeros((H,), jnp.float32)
    ln2g = jnp.ones((H,), jnp.float32); ln2b = jnp.zeros((H,), jnp.float32)
    # fc head: _init_weights -> normal(0, initializer_range), bias zero
    wfc = nrm(keys[6], (H, 1)); bfc = jnp.zeros((1,), jnp.float32)
    word_emb = nrm(keys[7], (V, H))
    pos_emb = nrm(keys[8], (S, H))
    params = (wq, bq, wk, bk, wv, bv, wo, bo,
              ln1g, ln1b, w1, b1, w2, b2, ln2g, ln2b, wfc, bfc)
    return params, word_emb, pos_emb


if __name__ == "__main__":
    key = jax.random.PRNGKey(0)
    kp, kid = jax.random.split(key)
    params, word_emb, pos_emb = init_params(kp)

    # inputs dict analogue: input_ids + attention_mask
    input_ids = jax.random.randint(kid, (B, S), 0, V, dtype=jnp.int32)
    attention_mask = jnp.ones((B, S, 1), jnp.float32)

    # embeddings (glue JAX): word + position, LayerNorm
    x = word_emb[input_ids] + pos_emb[None, :, :]
    mu = jnp.mean(x, axis=-1, keepdims=True)
    var = jnp.mean((x - mu) ** 2, axis=-1, keepdims=True)
    x = (x - mu) / jnp.sqrt(var + LN_EPS)

    out = jax.block_until_ready(custom_model_forward(x, attention_mask, params))
    ref = jax.block_until_ready(reference_forward(x, attention_mask, params))
    np.testing.assert_allclose(np.asarray(out), np.asarray(ref), atol=1e-4, rtol=1e-4)
    assert out.shape == (B, S, 1)
    print("KERNEL_OK")
</pallas_src>

<mosaic_0001>
module attributes {stable_mosaic.version = 11 : i64} {
  func.func @encoder_fc_kernel(%arg0: memref<16x32xf32, #tpu.memory_space<vmem>>, %arg1: memref<32x96xf32, #tpu.memory_space<vmem>>, %arg2: memref<32x32xf32, #tpu.memory_space<vmem>>, %arg3: memref<32x64xf32, #tpu.memory_space<vmem>>, %arg4: memref<64x32xf32, #tpu.memory_space<vmem>>, %arg5: memref<11x96xf32, #tpu.memory_space<vmem>>, %arg6: memref<1x128xf32, #tpu.memory_space<vmem>>) attributes {dimension_semantics = [], scalar_prefetch = 0 : i64, scratch_operands = 0 : i64, tpu.core_type = #tpu.core_type<tc>} {
    %c0 = arith.constant 0 : index
    %c0_0 = arith.constant 0 : index
    %0 = vector.load %arg0[%c0, %c0_0] : memref<16x32xf32, #tpu.memory_space<vmem>>, vector<16x32xf32>
    %c0_1 = arith.constant 0 : index
    %c0_2 = arith.constant 0 : index
    %1 = vector.load %arg5[%c0_1, %c0_2] : memref<11x96xf32, #tpu.memory_space<vmem>>, vector<1x96xf32>
    %c1 = arith.constant 1 : index
    %c0_3 = arith.constant 0 : index
    %2 = vector.load %arg5[%c1, %c0_3] : memref<11x96xf32, #tpu.memory_space<vmem>>, vector<1x64xf32>
    %c2 = arith.constant 2 : index
    %c0_4 = arith.constant 0 : index
    %3 = vector.load %arg5[%c2, %c0_4] : memref<11x96xf32, #tpu.memory_space<vmem>>, vector<1x32xf32>
    %c3 = arith.constant 3 : index
    %c0_5 = arith.constant 0 : index
    %4 = vector.load %arg5[%c3, %c0_5] : memref<11x96xf32, #tpu.memory_space<vmem>>, vector<1x32xf32>
    %c4 = arith.constant 4 : index
    %c0_6 = arith.constant 0 : index
    %5 = vector.load %arg5[%c4, %c0_6] : memref<11x96xf32, #tpu.memory_space<vmem>>, vector<1x32xf32>
    %c5 = arith.constant 5 : index
    %c0_7 = arith.constant 0 : index
    %6 = vector.load %arg5[%c5, %c0_7] : memref<11x96xf32, #tpu.memory_space<vmem>>, vector<1x32xf32>
    %c6 = arith.constant 6 : index
    %c0_8 = arith.constant 0 : index
    %7 = vector.load %arg5[%c6, %c0_8] : memref<11x96xf32, #tpu.memory_space<vmem>>, vector<1x32xf32>
    %c7 = arith.constant 7 : index
    %c0_9 = arith.constant 0 : index
    %8 = vector.load %arg5[%c7, %c0_9] : memref<11x96xf32, #tpu.memory_space<vmem>>, vector<1x32xf32>
    %c8 = arith.constant 8 : index
    %c0_10 = arith.constant 0 : index
    %9 = vector.load %arg5[%c8, %c0_10] : memref<11x96xf32, #tpu.memory_space<vmem>>, vector<1x32xf32>
    %c9 = arith.constant 9 : index
    %c0_11 = arith.constant 0 : index
    %10 = vector.load %arg5[%c9, %c0_11] : memref<11x96xf32, #tpu.memory_space<vmem>>, vector<1x1xf32>
    %c10 = arith.constant 10 : index
    %c0_12 = arith.constant 0 : index
    %11 = vector.load %arg5[%c10, %c0_12] : memref<11x96xf32, #tpu.memory_space<vmem>>, vector<1x16xf32>
    %c0_13 = arith.constant 0 : index
    %c0_14 = arith.constant 0 : index
    %12 = vector.load %arg1[%c0_13, %c0_14] : memref<32x96xf32, #tpu.memory_space<vmem>>, vector<32x96xf32>
    %cst = arith.constant dense<0.000000e+00> : vector<16x96xf32>
    %13 = tpu.matmul %0, %12, %cst {dimension_numbers = #tpu.dot_dimension_numbers<[1], [0], [0], [1], [0, 0, 1, 1], [], []>} : vector<16x32xf32>, vector<32x96xf32>, vector<16x96xf32> -> vector<16x96xf32>
    %14 = vector.broadcast %1 : vector<1x96xf32> to vector<16x96xf32>
    %15 = arith.addf %13, %14 : vector<16x96xf32>
    %16 = vector.extract_strided_slice %15 {offsets = [0, 0], sizes = [16, 32], strides = [1, 1]} : vector<16x96xf32> to vector<16x32xf32>
    %17 = vector.extract_strided_slice %15 {offsets = [0, 32], sizes = [16, 32], strides = [1, 1]} : vector<16x96xf32> to vector<16x32xf32>
    %18 = vector.extract_strided_slice %15 {offsets = [0, 64], sizes = [16, 32], strides = [1, 1]} : vector<16x96xf32> to vector<16x32xf32>
    %19 = vector.extract_strided_slice %11 {offsets = [0, 0], sizes = [1, 8], strides = [1, 1]} : vector<1x16xf32> to vector<1x8xf32>
    %20 = vector.extract_strided_slice %16 {offsets = [0, 0], sizes = [8, 8], strides = [1, 1]} : vector<16x32xf32> to vector<8x8xf32>
    %21 = vector.extract_strided_slice %17 {offsets = [0, 0], sizes = [8, 8], strides = [1, 1]} : vector<16x32xf32> to vector<8x8xf32>
    %22 = vector.extract_strided_slice %18 {offsets = [0, 0], sizes = [8, 8], strides = [1, 1]} : vector<16x32xf32> to vector<8x8xf32>
    %cst_15 = arith.constant dense<0.000000e+00> : vector<8x8xf32>
    %23 = tpu.matmul %20, %21, %cst_15 {dimension_numbers = #tpu.dot_dimension_numbers<[1], [1], [0], [0], [0, 0, 1, 0], [], []>} : vector<8x8xf32>, vector<8x8xf32>, vector<8x8xf32> -> vector<8x8xf32>
    %cst_16 = arith.constant 5.000000e-01 : f32
    %24 = vector.broadcast %cst_16 : f32 to vector<1x8xf32>
    %25 = arith.cmpf ogt, %19, %24 : vector<1x8xf32>
    %cst_17 = arith.constant -1.000000e+09 : f32
    %26 = vector.shape_cast %25 : vector<1x8xi1> to vector<1x8xi1>
    %27 = vector.broadcast %26 : vector<1x8xi1> to vector<8x8xi1>
    %28 = vector.broadcast %cst_17 : f32 to vector<8x8xf32>
    %29 = arith.select %27, %23, %28 : vector<8x8xi1>, vector<8x8xf32>
    %cst_18 = arith.constant dense<0xFF800000> : vector<8xf32>
    %30 = vector.multi_reduction <maximumf>, %29, %cst_18 [1] : vector<8x8xf32> to vector<8xf32>
    %31 = vector.shape_cast %30 : vector<8xf32> to vector<8x1xf32>
    %32 = vector.broadcast %31 : vector<8x1xf32> to vector<8x8xf32>
    %33 = arith.subf %29, %32 : vector<8x8xf32>
    %34 = math.exp %33 : vector<8x8xf32>
    %cst_19 = arith.constant dense<0.000000e+00> : vector<8xf32>
    %35 = vector.multi_reduction <add>, %34, %cst_19 [1] : vector<8x8xf32> to vector<8xf32>
    %36 = vector.shape_cast %35 : vector<8xf32> to vector<8x1xf32>
    %37 = vector.broadcast %36 : vector<8x1xf32> to vector<8x8xf32>
    %38 = arith.divf %34, %37 : vector<8x8xf32>
    %cst_20 = arith.constant dense<0.000000e+00> : vector<8x8xf32>
    %39 = tpu.matmul %38, %22, %cst_20 {dimension_numbers = #tpu.dot_dimension_numbers<[1], [0], [0], [1], [0, 0, 1, 1], [], []>} : vector<8x8xf32>, vector<8x8xf32>, vector<8x8xf32> -> vector<8x8xf32>
    %40 = vector.extract_strided_slice %16 {offsets = [0, 8], sizes = [8, 8], strides = [1, 1]} : vector<16x32xf32> to vector<8x8xf32>
    %41 = vector.extract_strided_slice %17 {offsets = [0, 8], sizes = [8, 8], strides = [1, 1]} : vector<16x32xf32> to vector<8x8xf32>
    %42 = vector.extract_strided_slice %18 {offsets = [0, 8], sizes = [8, 8], strides = [1, 1]} : vector<16x32xf32> to vector<8x8xf32>
    %cst_21 = arith.constant dense<0.000000e+00> : vector<8x8xf32>
    %43 = tpu.matmul %40, %41, %cst_21 {dimension_numbers = #tpu.dot_dimension_numbers<[1], [1], [0], [0], [0, 0, 1, 0], [], []>} : vector<8x8xf32>, vector<8x8xf32>, vector<8x8xf32> -> vector<8x8xf32>
    %cst_22 = arith.constant 5.000000e-01 : f32
    %44 = vector.broadcast %cst_22 : f32 to vector<1x8xf32>
    %45 = arith.cmpf ogt, %19, %44 : vector<1x8xf32>
    %cst_23 = arith.constant -1.000000e+09 : f32
    %46 = vector.shape_cast %45 : vector<1x8xi1> to vector<1x8xi1>
    %47 = vector.broadcast %46 : vector<1x8xi1> to vector<8x8xi1>
    %48 = vector.broadcast %cst_23 : f32 to vector<8x8xf32>
    %49 = arith.select %47, %43, %48 : vector<8x8xi1>, vector<8x8xf32>
    %cst_24 = arith.constant dense<0xFF800000> : vector<8xf32>
    %50 = vector.multi_reduction <maximumf>, %49, %cst_24 [1] : vector<8x8xf32> to vector<8xf32>
    %51 = vector.shape_cast %50 : vector<8xf32> to vector<8x1xf32>
    %52 = vector.broadcast %51 : vector<8x1xf32> to vector<8x8xf32>
    %53 = arith.subf %49, %52 : vector<8x8xf32>
    %54 = math.exp %53 : vector<8x8xf32>
    %cst_25 = arith.constant dense<0.000000e+00> : vector<8xf32>
    %55 = vector.multi_reduction <add>, %54, %cst_25 [1] : vector<8x8xf32> to vector<8xf32>
    %56 = vector.shape_cast %55 : vector<8xf32> to vector<8x1xf32>
    %57 = vector.broadcast %56 : vector<8x1xf32> to vector<8x8xf32>
    %58 = arith.divf %54, %57 : vector<8x8xf32>
    %cst_26 = arith.constant dense<0.000000e+00> : vector<8x8xf32>
    %59 = tpu.matmul %58, %42, %cst_26 {dimension_numbers = #tpu.dot_dimension_numbers<[1], [0], [0], [1], [0, 0, 1, 1], [], []>} : vector<8x8xf32>, vector<8x8xf32>, vector<8x8xf32> -> vector<8x8xf32>
    %60 = vector.extract_strided_slice %16 {offsets = [0, 16], sizes = [8, 8], strides = [1, 1]} : vector<16x32xf32> to vector<8x8xf32>
    %61 = vector.extract_strided_slice %17 {offsets = [0, 16], sizes = [8, 8], strides = [1, 1]} : vector<16x32xf32> to vector<8x8xf32>
    %62 = vector.extract_strided_slice %18 {offsets = [0, 16], sizes = [8, 8], strides = [1, 1]} : vector<16x32xf32> to vector<8x8xf32>
    %cst_27 = arith.constant dense<0.000000e+00> : vector<8x8xf32>
    %63 = tpu.matmul %60, %61, %cst_27 {dimension_numbers = #tpu.dot_dimension_numbers<[1], [1], [0], [0], [0, 0, 1, 0], [], []>} : vector<8x8xf32>, vector<8x8xf32>, vector<8x8xf32> -> vector<8x8xf32>
    %cst_28 = arith.constant 5.000000e-01 : f32
    %64 = vector.broadcast %cst_28 : f32 to vector<1x8xf32>
    %65 = arith.cmpf ogt, %19, %64 : vector<1x8xf32>
    %cst_29 = arith.constant -1.000000e+09 : f32
    %66 = vector.shape_cast %65 : vector<1x8xi1> to vector<1x8xi1>
    %67 = vector.broadcast %66 : vector<1x8xi1> to vector<8x8xi1>
    %68 = vector.broadcast %cst_29 : f32 to vector<8x8xf32>
    %69 = arith.select %67, %63, %68 : vector<8x8xi1>, vector<8x8xf32>
    %cst_30 = arith.constant dense<0xFF800000> : vector<8xf32>
    %70 = vector.multi_reduction <maximumf>, %69, %cst_30 [1] : vector<8x8xf32> to vector<8xf32>
    %71 = vector.shape_cast %70 : vector<8xf32> to vector<8x1xf32>
    %72 = vector.broadcast %71 : vector<8x1xf32> to vector<8x8xf32>
    %73 = arith.subf %69, %72 : vector<8x8xf32>
    %74 = math.exp %73 : vector<8x8xf32>
    %cst_31 = arith.constant dense<0.000000e+00> : vector<8xf32>
    %75 = vector.multi_reduction <add>, %74, %cst_31 [1] : vector<8x8xf32> to vector<8xf32>
    %76 = vector.shape_cast %75 : vector<8xf32> to vector<8x1xf32>
    %77 = vector.broadcast %76 : vector<8x1xf32> to vector<8x8xf32>
    %78 = arith.divf %74, %77 : vector<8x8xf32>
    %cst_32 = arith.constant dense<0.000000e+00> : vector<8x8xf32>
    %79 = tpu.matmul %78, %62, %cst_32 {dimension_numbers = #tpu.dot_dimension_numbers<[1], [0], [0], [1], [0, 0, 1, 1], [], []>} : vector<8x8xf32>, vector<8x8xf32>, vector<8x8xf32> -> vector<8x8xf32>
    %80 = vector.extract_strided_slice %16 {offsets = [0, 24], sizes = [8, 8], strides = [1, 1]} : vector<16x32xf32> to vector<8x8xf32>
    %81 = vector.extract_strided_slice %17 {offsets = [0, 24], sizes = [8, 8], strides = [1, 1]} : vector<16x32xf32> to vector<8x8xf32>
    %82 = vector.extract_strided_slice %18 {offsets = [0, 24], sizes = [8, 8], strides = [1, 1]} : vector<16x32xf32> to vector<8x8xf32>
    %cst_33 = arith.constant dense<0.000000e+00> : vector<8x8xf32>
    %83 = tpu.matmul %80, %81, %cst_33 {dimension_numbers = #tpu.dot_dimension_numbers<[1], [1], [0], [0], [0, 0, 1, 0], [], []>} : vector<8x8xf32>, vector<8x8xf32>, vector<8x8xf32> -> vector<8x8xf32>
    %cst_34 = arith.constant 5.000000e-01 : f32
    %84 = vector.broadcast %cst_34 : f32 to vector<1x8xf32>
    %85 = arith.cmpf ogt, %19, %84 : vector<1x8xf32>
    %cst_35 = arith.constant -1.000000e+09 : f32
    %86 = vector.shape_cast %85 : vector<1x8xi1> to vector<1x8xi1>
    %87 = vector.broadcast %86 : vector<1x8xi1> to vector<8x8xi1>
    %88 = vector.broadcast %cst_35 : f32 to vector<8x8xf32>
    %89 = arith.select %87, %83, %88 : vector<8x8xi1>, vector<8x8xf32>
    %cst_36 = arith.constant dense<0xFF800000> : vector<8xf32>
    %90 = vector.multi_reduction <maximumf>, %89, %cst_36 [1] : vector<8x8xf32> to vector<8xf32>
    %91 = vector.shape_cast %90 : vector<8xf32> to vector<8x1xf32>
    %92 = vector.broadcast %91 : vector<8x1xf32> to vector<8x8xf32>
    %93 = arith.subf %89, %92 : vector<8x8xf32>
    %94 = math.exp %93 : vector<8x8xf32>
    %cst_37 = arith.constant dense<0.000000e+00> : vector<8xf32>
    %95 = vector.multi_reduction <add>, %94, %cst_37 [1] : vector<8x8xf32> to vector<8xf32>
    %96 = vector.shape_cast %95 : vector<8xf32> to vector<8x1xf32>
    %97 = vector.broadcast %96 : vector<8x1xf32> to vector<8x8xf32>
    %98 = arith.divf %94, %97 : vector<8x8xf32>
    %cst_38 = arith.constant dense<0.000000e+00> : vector<8x8xf32>
    %99 = tpu.matmul %98, %82, %cst_38 {dimension_numbers = #tpu.dot_dimension_numbers<[1], [0], [0], [1], [0, 0, 1, 1], [], []>} : vector<8x8xf32>, vector<8x8xf32>, vector<8x8xf32> -> vector<8x8xf32>
    %100 = tpu.concatenate %39, %59, %79, %99 in 1 : vector<8x8xf32>, vector<8x8xf32>, vector<8x8xf32>, vector<8x8xf32> -> vector<8x32xf32>
    %101 = vector.extract_strided_slice %11 {offsets = [0, 8], sizes = [1, 8], strides = [1, 1]} : vector<1x16xf32> to vector<1x8xf32>
    %102 = vector.extract_strided_slice %16 {offsets = [8, 0], sizes = [8, 8], strides = [1, 1]} : vector<16x32xf32> to vector<8x8xf32>
    %103 = vector.extract_strided_slice %17 {offsets = [8, 0], sizes = [8, 8], strides = [1, 1]} : vector<16x32xf32> to vector<8x8xf32>
    %104 = vector.extract_strided_slice %18 {offsets = [8, 0], sizes = [8, 8], strides = [1, 1]} : vector<16x32xf32> to vector<8x8xf32>
    %cst_39 = arith.constant dense<0.000000e+00> : vector<8x8xf32>
    %105 = tpu.matmul %102, %103, %cst_39 {dimension_numbers = #tpu.dot_dimension_numbers<[1], [1], [0], [0], [0, 0, 1, 0], [], []>} : vector<8x8xf32>, vector<8x8xf32>, vector<8x8xf32> -> vector<8x8xf32>
    %cst_40 = arith.constant 5.000000e-01 : f32
    %106 = vector.broadcast %cst_40 : f32 to vector<1x8xf32>
    %107 = arith.cmpf ogt, %101, %106 : vector<1x8xf32>
    %cst_41 = arith.constant -1.000000e+09 : f32
    %108 = vector.shape_cast %107 : vector<1x8xi1> to vector<1x8xi1>
    %109 = vector.broadcast %108 : vector<1x8xi1> to vector<8x8xi1>
    %110 = vector.broadcast %cst_41 : f32 to vector<8x8xf32>
    %111 = arith.select %109, %105, %110 : vector<8x8xi1>, vector<8x8xf32>
    %cst_42 = arith.constant dense<0xFF800000> : vector<8xf32>
    %112 = vector.multi_reduction <maximumf>, %111, %cst_42 [1] : vector<8x8xf32> to vector<8xf32>
    %113 = vector.shape_cast %112 : vector<8xf32> to vector<8x1xf32>
    %114 = vector.broadcast %113 : vector<8x1xf32> to vector<8x8xf32>
    %115 = arith.subf %111, %114 : vector<8x8xf32>
    %116 = math.exp %115 : vector<8x8xf32>
    %cst_43 = arith.constant dense<0.000000e+00> : vector<8xf32>
    %117 = vector.multi_reduction <add>, %116, %cst_43 [1] : vector<8x8xf32> to vector<8xf32>
    %118 = vector.shape_cast %117 : vector<8xf32> to vector<8x1xf32>
    %119 = vector.broadcast %118 : vector<8x1xf32> to vector<8x8xf32>
    %120 = arith.divf %116, %119 : vector<8x8xf32>
    %cst_44 = arith.constant dense<0.000000e+00> : vector<8x8xf32>
    %121 = tpu.matmul %120, %104, %cst_44 {dimension_numbers = #tpu.dot_dimension_numbers<[1], [0], [0], [1], [0, 0, 1, 1], [], []>} : vector<8x8xf32>, vector<8x8xf32>, vector<8x8xf32> -> vector<8x8xf32>
    %122 = vector.extract_strided_slice %16 {offsets = [8, 8], sizes = [8, 8], strides = [1, 1]} : vector<16x32xf32> to vector<8x8xf32>
    %123 = vector.extract_strided_slice %17 {offsets = [8, 8], sizes = [8, 8], strides = [1, 1]} : vector<16x32xf32> to vector<8x8xf32>
    %124 = vector.extract_strided_slice %18 {offsets = [8, 8], sizes = [8, 8], strides = [1, 1]} : vector<16x32xf32> to vector<8x8xf32>
    %cst_45 = arith.constant dense<0.000000e+00> : vector<8x8xf32>
    %125 = tpu.matmul %122, %123, %cst_45 {dimension_numbers = #tpu.dot_dimension_numbers<[1], [1], [0], [0], [0, 0, 1, 0], [], []>} : vector<8x8xf32>, vector<8x8xf32>, vector<8x8xf32> -> vector<8x8xf32>
    %cst_46 = arith.constant 5.000000e-01 : f32
    %126 = vector.broadcast %cst_46 : f32 to vector<1x8xf32>
    %127 = arith.cmpf ogt, %101, %126 : vector<1x8xf32>
    %cst_47 = arith.constant -1.000000e+09 : f32
    %128 = vector.shape_cast %127 : vector<1x8xi1> to vector<1x8xi1>
    %129 = vector.broadcast %128 : vector<1x8xi1> to vector<8x8xi1>
    %130 = vector.broadcast %cst_47 : f32 to vector<8x8xf32>
    %131 = arith.select %129, %125, %130 : vector<8x8xi1>, vector<8x8xf32>
    %cst_48 = arith.constant dense<0xFF800000> : vector<8xf32>
    %132 = vector.multi_reduction <maximumf>, %131, %cst_48 [1] : vector<8x8xf32> to vector<8xf32>
    %133 = vector.shape_cast %132 : vector<8xf32> to vector<8x1xf32>
    %134 = vector.broadcast %133 : vector<8x1xf32> to vector<8x8xf32>
    %135 = arith.subf %131, %134 : vector<8x8xf32>
    %136 = math.exp %135 : vector<8x8xf32>
    %cst_49 = arith.constant dense<0.000000e+00> : vector<8xf32>
    %137 = vector.multi_reduction <add>, %136, %cst_49 [1] : vector<8x8xf32> to vector<8xf32>
    %138 = vector.shape_cast %137 : vector<8xf32> to vector<8x1xf32>
    %139 = vector.broadcast %138 : vector<8x1xf32> to vector<8x8xf32>
    %140 = arith.divf %136, %139 : vector<8x8xf32>
    %cst_50 = arith.constant dense<0.000000e+00> : vector<8x8xf32>
    %141 = tpu.matmul %140, %124, %cst_50 {dimension_numbers = #tpu.dot_dimension_numbers<[1], [0], [0], [1], [0, 0, 1, 1], [], []>} : vector<8x8xf32>, vector<8x8xf32>, vector<8x8xf32> -> vector<8x8xf32>
    %142 = vector.extract_strided_slice %16 {offsets = [8, 16], sizes = [8, 8], strides = [1, 1]} : vector<16x32xf32> to vector<8x8xf32>
    %143 = vector.extract_strided_slice %17 {offsets = [8, 16], sizes = [8, 8], strides = [1, 1]} : vector<16x32xf32> to vector<8x8xf32>
    %144 = vector.extract_strided_slice %18 {offsets = [8, 16], sizes = [8, 8], strides = [1, 1]} : vector<16x32xf32> to vector<8x8xf32>
    %cst_51 = arith.constant dense<0.000000e+00> : vector<8x8xf32>
    %145 = tpu.matmul %142, %143, %cst_51 {dimension_numbers = #tpu.dot_dimension_numbers<[1], [1], [0], [0], [0, 0, 1, 0], [], []>} : vector<8x8xf32>, vector<8x8xf32>, vector<8x8xf32> -> vector<8x8xf32>
    %cst_52 = arith.constant 5.000000e-01 : f32
    %146 = vector.broadcast %cst_52 : f32 to vector<1x8xf32>
    %147 = arith.cmpf ogt, %101, %146 : vector<1x8xf32>
    %cst_53 = arith.constant -1.000000e+09 : f32
    %148 = vector.shape_cast %147 : vector<1x8xi1> to vector<1x8xi1>
    %149 = vector.broadcast %148 : vector<1x8xi1> to vector<8x8xi1>
    %150 = vector.broadcast %cst_53 : f32 to vector<8x8xf32>
    %151 = arith.select %149, %145, %150 : vector<8x8xi1>, vector<8x8xf32>
    %cst_54 = arith.constant dense<0xFF800000> : vector<8xf32>
    %152 = vector.multi_reduction <maximumf>, %151, %cst_54 [1] : vector<8x8xf32> to vector<8xf32>
    %153 = vector.shape_cast %152 : vector<8xf32> to vector<8x1xf32>
    %154 = vector.broadcast %153 : vector<8x1xf32> to vector<8x8xf32>
    %155 = arith.subf %151, %154 : vector<8x8xf32>
    %156 = math.exp %155 : vector<8x8xf32>
    %cst_55 = arith.constant dense<0.000000e+00> : vector<8xf32>
    %157 = vector.multi_reduction <add>, %156, %cst_55 [1] : vector<8x8xf32> to vector<8xf32>
    %158 = vector.shape_cast %157 : vector<8xf32> to vector<8x1xf32>
    %159 = vector.broadcast %158 : vector<8x1xf32> to vector<8x8xf32>
    %160 = arith.divf %156, %159 : vector<8x8xf32>
    %cst_56 = arith.constant dense<0.000000e+00> : vector<8x8xf32>
    %161 = tpu.matmul %160, %144, %cst_56 {dimension_numbers = #tpu.dot_dimension_numbers<[1], [0], [0], [1], [0, 0, 1, 1], [], []>} : vector<8x8xf32>, vector<8x8xf32>, vector<8x8xf32> -> vector<8x8xf32>
    %162 = vector.extract_strided_slice %16 {offsets = [8, 24], sizes = [8, 8], strides = [1, 1]} : vector<16x32xf32> to vector<8x8xf32>
    %163 = vector.extract_strided_slice %17 {offsets = [8, 24], sizes = [8, 8], strides = [1, 1]} : vector<16x32xf32> to vector<8x8xf32>
    %164 = vector.extract_strided_slice %18 {offsets = [8, 24], sizes = [8, 8], strides = [1, 1]} : vector<16x32xf32> to vector<8x8xf32>
    %cst_57 = arith.constant dense<0.000000e+00> : vector<8x8xf32>
    %165 = tpu.matmul %162, %163, %cst_57 {dimension_numbers = #tpu.dot_dimension_numbers<[1], [1], [0], [0], [0, 0, 1, 0], [], []>} : vector<8x8xf32>, vector<8x8xf32>, vector<8x8xf32> -> vector<8x8xf32>
    %cst_58 = arith.constant 5.000000e-01 : f32
    %166 = vector.broadcast %cst_58 : f32 to vector<1x8xf32>
    %167 = arith.cmpf ogt, %101, %166 : vector<1x8xf32>
    %cst_59 = arith.constant -1.000000e+09 : f32
    %168 = vector.shape_cast %167 : vector<1x8xi1> to vector<1x8xi1>
    %169 = vector.broadcast %168 : vector<1x8xi1> to vector<8x8xi1>
    %170 = vector.broadcast %cst_59 : f32 to vector<8x8xf32>
    %171 = arith.select %169, %165, %170 : vector<8x8xi1>, vector<8x8xf32>
    %cst_60 = arith.constant dense<0xFF800000> : vector<8xf32>
    %172 = vector.multi_reduction <maximumf>, %171, %cst_60 [1] : vector<8x8xf32> to vector<8xf32>
    %173 = vector.shape_cast %172 : vector<8xf32> to vector<8x1xf32>
    %174 = vector.broadcast %173 : vector<8x1xf32> to vector<8x8xf32>
    %175 = arith.subf %171, %174 : vector<8x8xf32>
    %176 = math.exp %175 : vector<8x8xf32>
    %cst_61 = arith.constant dense<0.000000e+00> : vector<8xf32>
    %177 = vector.multi_reduction <add>, %176, %cst_61 [1] : vector<8x8xf32> to vector<8xf32>
    %178 = vector.shape_cast %177 : vector<8xf32> to vector<8x1xf32>
    %179 = vector.broadcast %178 : vector<8x1xf32> to vector<8x8xf32>
    %180 = arith.divf %176, %179 : vector<8x8xf32>
    %cst_62 = arith.constant dense<0.000000e+00> : vector<8x8xf32>
    %181 = tpu.matmul %180, %164, %cst_62 {dimension_numbers = #tpu.dot_dimension_numbers<[1], [0], [0], [1], [0, 0, 1, 1], [], []>} : vector<8x8xf32>, vector<8x8xf32>, vector<8x8xf32> -> vector<8x8xf32>
    %182 = tpu.concatenate %121, %141, %161, %181 in 1 : vector<8x8xf32>, vector<8x8xf32>, vector<8x8xf32>, vector<8x8xf32> -> vector<8x32xf32>
    %183 = tpu.concatenate %100, %182 in 0 : vector<8x32xf32>, vector<8x32xf32> -> vector<16x32xf32>
    %c0_63 = arith.constant 0 : index
    %c0_64 = arith.constant 0 : index
    %184 = vector.load %arg2[%c0_63, %c0_64] : memref<32x32xf32, #tpu.memory_space<vmem>>, vector<32x32xf32>
    %cst_65 = arith.constant dense<0.000000e+00> : vector<16x32xf32>
    %185 = tpu.matmul %183, %184, %cst_65 {dimension_numbers = #tpu.dot_dimension_numbers<[1], [0], [0], [1], [0, 0, 1, 1], [], []>} : vector<16x32xf32>, vector<32x32xf32>, vector<16x32xf32> -> vector<16x32xf32>
    %186 = vector.broadcast %3 : vector<1x32xf32> to vector<16x32xf32>
    %187 = arith.addf %185, %186 : vector<16x32xf32>
    %188 = arith.addf %0, %187 : vector<16x32xf32>
    %cst_66 = arith.constant dense<0.000000e+00> : vector<16xf32>
    %189 = vector.multi_reduction <add>, %188, %cst_66 [1] : vector<16x32xf32> to vector<16xf32>
    %190 = vector.shape_cast %189 : vector<16xf32> to vector<16x1xf32>
    %cst_67 = arith.constant 3.200000e+01 : f32
    %191 = vector.broadcast %cst_67 : f32 to vector<16x1xf32>
    %192 = arith.divf %190, %191 : vector<16x1xf32>
    %193 = vector.broadcast %192 : vector<16x1xf32> to vector<16x32xf32>
    %194 = arith.subf %188, %193 : vector<16x32xf32>
    %195 = arith.mulf %194, %194 : vector<16x32xf32>
    %cst_68 = arith.constant dense<0.000000e+00> : vector<16xf32>
    %196 = vector.multi_reduction <add>, %195, %cst_68 [1] : vector<16x32xf32> to vector<16xf32>
    %197 = vector.shape_cast %196 : vector<16xf32> to vector<16x1xf32>
    %cst_69 = arith.constant 3.200000e+01 : f32
    %198 = vector.broadcast %cst_69 : f32 to vector<16x1xf32>
    %199 = arith.divf %197, %198 : vector<16x1xf32>
    %cst_70 = arith.constant 9.99999996E-13 : f32
    %200 = vector.broadcast %cst_70 : f32 to vector<16x1xf32>
    %201 = arith.addf %199, %200 : vector<16x1xf32>
    %202 = math.rsqrt %201 : vector<16x1xf32>
    %203 = vector.broadcast %202 : vector<16x1xf32> to vector<16x32xf32>
    %204 = arith.mulf %194, %203 : vector<16x32xf32>
    %205 = vector.broadcast %4 : vector<1x32xf32> to vector<16x32xf32>
    %206 = arith.mulf %204, %205 : vector<16x32xf32>
    %207 = vector.broadcast %5 : vector<1x32xf32> to vector<16x32xf32>
    %208 = arith.addf %206, %207 : vector<16x32xf32>
    %c0_71 = arith.constant 0 : index
    %c0_72 = arith.constant 0 : index
    %209 = vector.load %arg3[%c0_71, %c0_72] : memref<32x64xf32, #tpu.memory_space<vmem>>, vector<32x64xf32>
    %cst_73 = arith.constant dense<0.000000e+00> : vector<16x64xf32>
    %210 = tpu.matmul %208, %209, %cst_73 {dimension_numbers = #tpu.dot_dimension_numbers<[1], [0], [0], [1], [0, 0, 1, 1], [], []>} : vector<16x32xf32>, vector<32x64xf32>, vector<16x64xf32> -> vector<16x64xf32>
    %211 = vector.broadcast %2 : vector<1x64xf32> to vector<16x64xf32>
    %212 = arith.addf %210, %211 : vector<16x64xf32>
    %213 = arith.mulf %212, %212 : vector<16x64xf32>
    %214 = arith.mulf %212, %213 : vector<16x64xf32>
    %cst_74 = arith.constant 4.471500e-02 : f32
    %215 = vector.broadcast %cst_74 : f32 to vector<16x64xf32>
    %216 = arith.mulf %215, %214 : vector<16x64xf32>
    %217 = arith.addf %212, %216 : vector<16x64xf32>
    %cst_75 = arith.constant 0.797884583 : f32
    %218 = vector.broadcast %cst_75 : f32 to vector<16x64xf32>
    %219 = arith.mulf %218, %217 : vector<16x64xf32>
    %220 = math.tanh %219 : vector<16x64xf32>
    %cst_76 = arith.constant 1.000000e+00 : f32
    %221 = vector.broadcast %cst_76 : f32 to vector<16x64xf32>
    %222 = arith.addf %221, %220 : vector<16x64xf32>
    %cst_77 = arith.constant 5.000000e-01 : f32
    %223 = vector.broadcast %cst_77 : f32 to vector<16x64xf32>
    %224 = arith.mulf %223, %222 : vector<16x64xf32>
    %225 = arith.mulf %212, %224 : vector<16x64xf32>
    %c0_78 = arith.constant 0 : index
    %c0_79 = arith.constant 0 : index
    %226 = vector.load %arg4[%c0_78, %c0_79] : memref<64x32xf32, #tpu.memory_space<vmem>>, vector<64x32xf32>
    %cst_80 = arith.constant dense<0.000000e+00> : vector<16x32xf32>
    %227 = tpu.matmul %225, %226, %cst_80 {dimension_numbers = #tpu.dot_dimension_numbers<[1], [0], [0], [1], [0, 0, 1, 1], [], []>} : vector<16x64xf32>, vector<64x32xf32>, vector<16x32xf32> -> vector<16x32xf32>
    %228 = arith.addf %208, %227 : vector<16x32xf32>
    %229 = vector.broadcast %6 : vector<1x32xf32> to vector<16x32xf32>
    %230 = arith.addf %228, %229 : vector<16x32xf32>
    %cst_81 = arith.constant dense<0.000000e+00> : vector<16xf32>
    %231 = vector.multi_reduction <add>, %230, %cst_81 [1] : vector<16x32xf32> to vector<16xf32>
    %232 = vector.shape_cast %231 : vector<16xf32> to vector<16x1xf32>
    %cst_82 = arith.constant 3.200000e+01 : f32
    %233 = vector.broadcast %cst_82 : f32 to vector<16x1xf32>
    %234 = arith.divf %232, %233 : vector<16x1xf32>
    %235 = vector.broadcast %234 : vector<16x1xf32> to vector<16x32xf32>
    %236 = arith.subf %230, %235 : vector<16x32xf32>
    %237 = arith.mulf %236, %236 : vector<16x32xf32>
    %cst_83 = arith.constant dense<0.000000e+00> : vector<16xf32>
    %238 = vector.multi_reduction <add>, %237, %cst_83 [1] : vector<16x32xf32> to vector<16xf32>
    %239 = vector.shape_cast %238 : vector<16xf32> to vector<16x1xf32>
    %cst_84 = arith.constant 3.200000e+01 : f32
    %240 = vector.broadcast %cst_84 : f32 to vector<16x1xf32>
    %241 = arith.divf %239, %240 : vector<16x1xf32>
    %cst_85 = arith.constant 9.99999996E-13 : f32
    %242 = vector.broadcast %cst_85 : f32 to vector<16x1xf32>
    %243 = arith.addf %241, %242 : vector<16x1xf32>
    %244 = math.rsqrt %243 : vector<16x1xf32>
    %245 = vector.broadcast %244 : vector<16x1xf32> to vector<16x32xf32>
    %246 = arith.mulf %236, %245 : vector<16x32xf32>
    %247 = vector.broadcast %7 : vector<1x32xf32> to vector<16x32xf32>
    %248 = arith.mulf %246, %247 : vector<16x32xf32>
    %249 = vector.broadcast %8 : vector<1x32xf32> to vector<16x32xf32>
    %250 = arith.addf %248, %249 : vector<16x32xf32>
    %cst_86 = arith.constant dense<0.000000e+00> : vector<1x16xf32>
    %251 = tpu.matmul %9, %250, %cst_86 {dimension_numbers = #tpu.dot_dimension_numbers<[1], [1], [0], [0], [0, 0, 1, 0], [], []>} : vector<1x32xf32>, vector<16x32xf32>, vector<1x16xf32> -> vector<1x16xf32>
    %252 = vector.broadcast %10 : vector<1x1xf32> to vector<1x16xf32>
    %253 = arith.addf %251, %252 : vector<1x16xf32>
    %cst_87 = arith.constant 0.000000e+00 : f32
    %254 = vector.broadcast %cst_87 : f32 to vector<1x112xf32>
    %255 = tpu.concatenate %253, %254 in 1 : vector<1x16xf32>, vector<1x112xf32> -> vector<1x128xf32>
    %c0_88 = arith.constant 0 : index
    %c0_89 = arith.constant 0 : index
    %256 = vector.load %arg6[%c0_88, %c0_89] : memref<1x128xf32, #tpu.memory_space<vmem>>, vector<1x128xf32>
    tpu.vector_store %arg6[%c0_88, %c0_89], %255 {strides = array<i32>} : memref<1x128xf32, #tpu.memory_space<vmem>>, vector<1x128xf32>,
    return
  }
}

</mosaic_0001>

<llo_original>
// kernel: tpu_custom_call.1
$region0: #{tpu_custom_call.1}
  #allocation0 [shape = 'u32[]', space=smem, size = 0x4, offset = 0x4, fixed_abs, tag = 'smem constant byte address 0x4 - core index']
  #allocation1 [shape = 'u32[144,128]{1,0:T(1,128)}', space=vmem, size = 0x12000, scoped, tag = 'internal scratch']
  %s0 = inlined_call_operand.hbm [shape: f32[16,32], index: 0, kind: input, shape index: {}]
  %s1 = inlined_call_operand.vmem [shape: f32[32,96], index: 1, kind: input, shape index: {}]
  %s2 = inlined_call_operand.vmem [shape: f32[32,32], index: 2, kind: input, shape index: {}]
  %s3 = inlined_call_operand.vmem [shape: f32[32,64], index: 3, kind: input, shape index: {}]
  %s4 = inlined_call_operand.vmem [shape: f32[64,32], index: 4, kind: input, shape index: {}]
  %s5 = inlined_call_operand.hbm [shape: f32[11,96], index: 5, kind: input, shape index: {}]
  %s6 = inlined_call_operand.hbm [shape: f32[1,128], index: 6, kind: output, shape index: {}]
  %s7 = sld [smem:[#allocation0]]
  $region42: #{tpu_custom_call.1} parent=0
    _
  %s9 = ssub.s32 1, %s7
  %s10 = scalar_select 0, %s9, %s7
  $region1: #{tpu_custom_call.1} parent=0
    #allocation2 [shape = 'u8[8192]{0}', space=vmem, size = 0x2000, scoped, tag = 'input window, operand 0, single buffered']
    #allocation3 [shape = 's32[1]{0}', space=sflag, size = 0x4, scoped, tag = 'scoped memory for tpu_custom_call.1']
    #allocation4 [shape = 's32[1]{0}', space=sflag, size = 0x4, scoped, tag = 'scoped memory for tpu_custom_call.1']
    #allocation5 [shape = 'u8[8192]{0}', space=vmem, size = 0x2000, scoped, tag = 'input window, operand 5, single buffered']
    #allocation6 [shape = 's32[1]{0}', space=sflag, size = 0x4, scoped, tag = 'scoped memory for tpu_custom_call.1']
    #allocation7 [shape = 'u8[512]{0}', space=vmem, size = 0x400, scoped, tag = 'output window, operand 0, single buffered']
    %11 = vsyncpa [#allocation3], 0
    %12 = vsyncpa [#allocation6], 0
    %13 = vsyncpa [#allocation4], 0
    // Predicated region
    $region2: #{tpu_custom_call.1} parent=1 // pred_check
      _
    $region3: #{tpu_custom_call.1} parent=1 // pred_check_branch
      %15 = sbr.rel (0) target = $region5
    $region4: #{tpu_custom_call.1} parent=1 // pred_region
      %s17 = ssub.s32 256, 256
      %18 = vsyncadd [#allocation3], %s17
      %s19 = sshll.u32 [#allocation2], 4
      %s20 = int_to_ptr.vmem [resolvable:$true] %s19
      %25 = dma.hbm_to_vmem [thread:$0]  %s0, 256, %s20, [#allocation3], 128, 128, 8
    $region5: #{tpu_custom_call.1} parent=1 // pred_fallthru
      _
    // Predicated region
    $region6: #{tpu_custom_call.1} parent=1 // pred_check
      _
    $region7: #{tpu_custom_call.1} parent=1 // pred_check_branch
      %27 = sbr.rel (0) target = $region9
    $region8: #{tpu_custom_call.1} parent=1 // pred_region
      _
    $region9: #{tpu_custom_call.1} parent=1 // pred_fallthru
      _
    // Predicated region
    $region10: #{tpu_custom_call.1} parent=1 // pred_check
      _
    $region11: #{tpu_custom_call.1} parent=1 // pred_check_branch
      %29 = sbr.rel (0) target = $region13
    $region12: #{tpu_custom_call.1} parent=1 // pred_region
      _
    $region13: #{tpu_custom_call.1} parent=1 // pred_fallthru
      _
    // Predicated region
    $region14: #{tpu_custom_call.1} parent=1 // pred_check
      _
    $region15: #{tpu_custom_call.1} parent=1 // pred_check_branch
      %31 = sbr.rel (0) target = $region17
    $region16: #{tpu_custom_call.1} parent=1 // pred_region
      _
    $region17: #{tpu_custom_call.1} parent=1 // pred_fallthru
      _
    // Predicated region
    $region18: #{tpu_custom_call.1} parent=1 // pred_check
      _
    $region19: #{tpu_custom_call.1} parent=1 // pred_check_branch
      %33 = sbr.rel (0) target = $region21
    $region20: #{tpu_custom_call.1} parent=1 // pred_region
      _
    $region21: #{tpu_custom_call.1} parent=1 // pred_fallthru
      _
    // Predicated region
    $region22: #{tpu_custom_call.1} parent=1 // pred_check
      _
    $region23: #{tpu_custom_call.1} parent=1 // pred_check_branch
      %35 = sbr.rel (0) target = $region25
    $region24: #{tpu_custom_call.1} parent=1 // pred_region
      %s37 = ssub.s32 256, 256
      %38 = vsyncadd [#allocation6], %s37
      %s39 = sshll.u32 [#allocation5], 4
      %s40 = int_to_ptr.vmem [resolvable:$true] %s39
      %45 = dma.hbm_to_vmem [thread:$0]  %s5, 256, %s40, [#allocation6], 128, 128, 8
    $region25: #{tpu_custom_call.1} parent=1 // pred_fallthru
      _
    // Predicated region
    $region26: #{tpu_custom_call.1} parent=1 // pred_check
      _
    $region27: #{tpu_custom_call.1} parent=1 // pred_check_branch
      %47 = sbr.rel (0) target = $region29
    $region28: #{tpu_custom_call.1} parent=1 // pred_region
      %48 = dma.done [#allocation3], 256
    $region29: #{tpu_custom_call.1} parent=1 // pred_fallthru
      _
    // Predicated region
    $region30: #{tpu_custom_call.1} parent=1 // pred_check
      _
    $region31: #{tpu_custom_call.1} parent=1 // pred_check_branch
      %50 = sbr.rel (0) target = $region33
    $region32: #{tpu_custom_call.1} parent=1 // pred_region
      %51 = dma.done [#allocation6], 256
    $region33: #{tpu_custom_call.1} parent=1 // pred_fallthru
      _
    %v52 = vld [vmem:[#allocation2] sm:$0xff]
    %v53 = vld [vmem:[#allocation2 + $0x8] sm:$0xff]
    %v54 = vld [vmem:[#allocation5] sm:$0x1]
    %v55 = vld [vmem:[#allocation5 + $0x1] sm:$0x1]
    %v56 = vld [vmem:[#allocation5 + $0x2] sm:$0x1]
    %v57 = vld [vmem:[#allocation5 + $0x3] sm:$0x1]
    %v58 = vld [vmem:[#allocation5 + $0x4] sm:$0x1]
    %v59 = vld [vmem:[#allocation5 + $0x5] sm:$0x1]
    %v60 = vld [vmem:[#allocation5 + $0x6] sm:$0x1]
    %v61 = vld [vmem:[#allocation5 + $0x7] sm:$0x1]
    %v62 = vld [vmem:[#allocation5 + $0x8] sm:$0x1]
    %v63 = vld [vmem:[#allocation5 + $0x9] sm:$0x1]
    %v64 = vld [vmem:[#allocation5 + $0xa] sm:$0x1]
    %v65 = vld [vmem:[%s1] sm:$0xff]
    %v66 = vld [vmem:[%s1 + $0x8] sm:$0xff]
    %v67 = vld [vmem:[%s1 + $0x10] sm:$0xff]
    %v68 = vld [vmem:[%s1 + $0x18] sm:$0xff]
    %v69 = vlaneseq
    %v70 = vshrl.u32 %v69, 7
    %v71 = vsub.s32 0, %v70
    %v72 = vrot.slane %v54, %v71
    %vm73 = vcmask 261120
    %v75 = vsel %vm73, %v52, 0
    %v78 = vsel %vm73, %v53, 0
    %80 = vmatprep.subr.mxu0 0.0
    %81 = vmatpush1.msra.mxu0 0.0
    %82 = vmatprep.subr.mxu0 0.0
    %83 = vmatpush1.msra.mxu0 0.0
    %84 = vmatprep.subr.mxu0 0.0
    %85 = vmatpush1.msra.mxu0 0.0
    %86 = vmatprep.subr.mxu0 0.0
    %87 = vmatpush1.msra.mxu0 0.0
    %88 = vmatprep.subr.mxu0 0.0
    %89 = vmatpush1.msra.mxu0 0.0
    %90 = vmatprep.subr.mxu0 0.0
    %91 = vmatpush1.msra.mxu0 0.0
    %92 = vmatprep.subr.mxu0 0.0
    %93 = vmatpush1.msra.mxu0 0.0
    %94 = vmatprep.subr.mxu0 0.0
    %95 = vmatpush1.msra.mxu0 0.0
    %96 = vmatprep.subr.mxu0 0.0
    %97 = vmatpush1.msra.mxu0 0.0
    %98 = vmatprep.subr.mxu0 0.0
    %99 = vmatpush1.msra.mxu0 0.0
    %100 = vmatprep.subr.mxu0 0.0
    %101 = vmatpush1.msra.mxu0 0.0
    %102 = vmatprep.subr.mxu0 0.0
    %103 = vmatpush1.msra.mxu0 0.0
    %104 = vmatprep.subr.mxu0 0.0
    %105 = vmatpush1.msra.mxu0 %v68
    %106 = vmatprep.subr.mxu0 0.0
    %107 = vmatpush1.msra.mxu0 %v67
    %108 = vmatprep.subr.mxu0 0.0
    %109 = vmatpush1.msra.mxu0 %v66
    %110 = vmatprep.subr.mxu0 0.0
    %111 = vmatpush1.msra.mxu0 %v65
    %112 = vmatprep.subr.mxu0 0.0
    %113 = vmatpush2.msra.mxu0 0.0
    %114 = vmatprep.subr.mxu0 0.0
    %115 = vmatpush2.msra.mxu0 0.0
    %116 = vmatprep.subr.mxu0 0.0
    %117 = vmatpush2.msra.mxu0 0.0
    %118 = vmatprep.subr.mxu0 0.0
    %119 = vmatpush2.msra.mxu0 0.0
    %120 = vmatprep.subr.mxu0 0.0
    %121 = vmatpush2.msra.mxu0 0.0
    %122 = vmatprep.subr.mxu0 0.0
    %123 = vmatpush2.msra.mxu0 0.0
    %124 = vmatprep.subr.mxu0 0.0
    %125 = vmatpush2.msra.mxu0 0.0
    %126 = vmatprep.subr.mxu0 0.0
    %127 = vmatpush2.msra.mxu0 0.0
    %128 = vmatprep.subr.mxu0 0.0
    %129 = vmatpush2.msra.mxu0 0.0
    %130 = vmatprep.subr.mxu0 0.0
    %131 = vmatpush2.msra.mxu0 0.0
    %132 = vmatprep.subr.mxu0 0.0
    %133 = vmatpush2.msra.mxu0 0.0
    %134 = vmatprep.subr.mxu0 0.0
    %135 = vmatpush2.msra.mxu0 0.0
    %136 = vmatprep.subr.mxu0 0.0
    %137 = vmatpush2.msra.mxu0 0.0
    %138 = vmatprep.subr.mxu0 0.0
    %139 = vmatpush2.msra.mxu0 0.0
    %140 = vmatprep.subr.mxu0 0.0
    %141 = vmatpush2.msra.mxu0 0.0
    %142 = vmatprep.subr.mxu0 0.0
    %143 = vmatpush2.msra.mxu0 0.0
    %144 = vmatprep.mubr.f32.mxu0 0.0
    %145 = vmatmul.mubr.f32.gmra.mxu0 %v75
    %v146 = vpop.f32.mrf.mxu0
    %v147 = vadd.f32 %v72, %v146
    %v148 = vpop.f32.mrf.mxu0
    %149 = vmatprep.mubr.f32.mxu0 0.0
    %150 = vmatmul.mubr.f32.gmra.mxu0 %v78
    %v151 = vpop.f32.mrf.mxu0
    %v152 = vadd.f32 %v72, %v151
    %v153 = vpop.f32.mrf.mxu0
    %154 = vdwg.mxu0
    %156 = vrot.lane.b32.xlu0 %v147, 96
    %v157 = vpop.permute.xlu0 %156
    %vm158 = vcmask 64512
    %v159 = vsel %vm158, %v147, 0
    %v161 = vsel %vm158, %v157, 0
    %163 = vmatprep.subr.mxu0 0.0
    %164 = vmatpush1.xpose.msra.mxu0 0.0
    %165 = vmatprep.subr.mxu0 0.0
    %166 = vmatpush1.xpose.msra.mxu0 0.0
    %167 = vmatprep.subr.mxu0 0.0
    %168 = vmatpush1.xpose.msra.mxu0 0.0
    %169 = vmatprep.subr.mxu0 0.0
    %170 = vmatpush1.xpose.msra.mxu0 0.0
    %171 = vmatprep.subr.mxu0 0.0
    %172 = vmatpush1.xpose.msra.mxu0 0.0
    %173 = vmatprep.subr.mxu0 0.0
    %174 = vmatpush1.xpose.msra.mxu0 0.0
    %175 = vmatprep.subr.mxu0 0.0
    %176 = vmatpush1.xpose.msra.mxu0 0.0
    %177 = vmatprep.subr.mxu0 0.0
    %178 = vmatpush1.xpose.msra.mxu0 0.0
    %179 = vmatprep.subr.mxu0 0.0
    %180 = vmatpush1.xpose.msra.mxu0 0.0
    %181 = vmatprep.subr.mxu0 0.0
    %182 = vmatpush1.xpose.msra.mxu0 0.0
    %183 = vmatprep.subr.mxu0 0.0
    %184 = vmatpush1.xpose.msra.mxu0 0.0
    %185 = vmatprep.subr.mxu0 0.0
    %186 = vmatpush1.xpose.msra.mxu0 0.0
    %187 = vmatprep.subr.mxu0 0.0
    %188 = vmatpush1.xpose.msra.mxu0 0.0
    %189 = vmatprep.subr.mxu0 0.0
    %190 = vmatpush1.xpose.msra.mxu0 0.0
    %191 = vmatprep.subr.mxu0 0.0
    %192 = vmatpush1.xpose.msra.mxu0 0.0
    %193 = vmatprep.subr.mxu0 0.0
    %194 = vmatpush1.xpose.msra.mxu0 %v161
    %195 = vmatprep.subr.mxu0 0.0
    %196 = vmatpush2.xpose.msra.mxu0 0.0
    %197 = vmatprep.subr.mxu0 0.0
    %198 = vmatpush2.xpose.msra.mxu0 0.0
    %199 = vmatprep.subr.mxu0 0.0
    %200 = vmatpush2.xpose.msra.mxu0 0.0
    %201 = vmatprep.subr.mxu0 0.0
    %202 = vmatpush2.xpose.msra.mxu0 0.0
    %203 = vmatprep.subr.mxu0 0.0
    %204 = vmatpush2.xpose.msra.mxu0 0.0
    %205 = vmatprep.subr.mxu0 0.0
    %206 = vmatpush2.xpose.msra.mxu0 0.0
    %207 = vmatprep.subr.mxu0 0.0
    %208 = vmatpush2.xpose.msra.mxu0 0.0
    %209 = vmatprep.subr.mxu0 0.0
    %210 = vmatpush2.xpose.msra.mxu0 0.0
    %211 = vmatprep.subr.mxu0 0.0
    %212 = vmatpush2.xpose.msra.mxu0 0.0
    %213 = vmatprep.subr.mxu0 0.0
    %214 = vmatpush2.xpose.msra.mxu0 0.0
    %215 = vmatprep.subr.mxu0 0.0
    %216 = vmatpush2.xpose.msra.mxu0 0.0
    %217 = vmatprep.subr.mxu0 0.0
    %218 = vmatpush2.xpose.msra.mxu0 0.0
    %219 = vmatprep.subr.mxu0 0.0
    %220 = vmatpush2.xpose.msra.mxu0 0.0
    %221 = vmatprep.subr.mxu0 0.0
    %222 = vmatpush2.xpose.msra.mxu0 0.0
    %223 = vmatprep.subr.mxu0 0.0
    %224 = vmatpush2.xpose.msra.mxu0 0.0
    %225 = vmatprep.subr.mxu0 0.0
    %226 = vmatpush2.xpose.msra.mxu0 0.0
    %227 = vmatprep.mubr.f32.mxu0 0.0
    %228 = vmatmul.mubr.f32.gmra.mxu0 %v159
    %v229 = vpop.f32.mrf.mxu0
    %v230 = vadd.f32 0.0, %v229
    %v231 = vpop.f32.mrf.mxu0
    %232 = vdwg.mxu0
    %vm233 = vcmp.gt.f32.partialorder %v64, 0.5
    %v234 = vsel %vm233, 1, 0
    %v235 = vlaneseq
    %v236 = vshrl.u32 %v235, 7
    %v237 = vsub.s32 0, %v236
    %v238 = vrot.slane %v234, %v237
    %vm239 = vcmp.eq.s32.totalorder %v238, 1
    %v240 = vsel %vm239, %v230, -1e+09
    %v241 = vsel %vm158, %v240, -inf
    %242 = vmax.xlane.f32.xlu0 %v241
    %v243 = vpop.xlane.xlu0 %242
    %v244 = vsub.f32 %v240, %v243
    %v245 = vmul.f32 %v244, 1.442695
    %v246 = vpow.pop %v245
    %v247 = vsel %vm158, %v246, 0.0
    %248 = vadd.xlane.f32.xlu0 %v247
    %v249 = vpop.xlane.xlu0 %248
    %v250 = vrcp.pop %v249
    %v251 = vmul.f32 %v246, %v250
    %252 = vrot.lane.b32.xlu0 %v147, 64
    %v253 = vpop.permute.xlu0 %252
    %v256 = vsel %vm158, %v251, 0
    %258 = vmatprep.subr.mxu0 0.0
    %259 = vmatpush1.msra.mxu0 0.0
    %260 = vmatprep.subr.mxu0 0.0
    %261 = vmatpush1.msra.mxu0 0.0
    %262 = vmatprep.subr.mxu0 0.0
    %263 = vmatpush1.msra.mxu0 0.0
    %264 = vmatprep.subr.mxu0 0.0
    %265 = vmatpush1.msra.mxu0 0.0
    %266 = vmatprep.subr.mxu0 0.0
    %267 = vmatpush1.msra.mxu0 0.0
    %268 = vmatprep.subr.mxu0 0.0
    %269 = vmatpush1.msra.mxu0 0.0
    %270 = vmatprep.subr.mxu0 0.0
    %271 = vmatpush1.msra.mxu0 0.0
    %272 = vmatprep.subr.mxu0 0.0
    %273 = vmatpush1.msra.mxu0 0.0
    %274 = vmatprep.subr.mxu0 0.0
    %275 = vmatpush1.msra.mxu0 0.0
    %276 = vmatprep.subr.mxu0 0.0
    %277 = vmatpush1.msra.mxu0 0.0
    %278 = vmatprep.subr.mxu0 0.0
    %279 = vmatpush1.msra.mxu0 0.0
    %280 = vmatprep.subr.mxu0 0.0
    %281 = vmatpush1.msra.mxu0 0.0
    %282 = vmatprep.subr.mxu0 0.0
    %283 = vmatpush1.msra.mxu0 0.0
    %284 = vmatprep.subr.mxu0 0.0
    %285 = vmatpush1.msra.mxu0 0.0
    %286 = vmatprep.subr.mxu0 0.0
    %287 = vmatpush1.msra.mxu0 0.0
    %288 = vmatprep.subr.mxu0 0.0
    %289 = vmatpush1.msra.mxu0 %v253
    %290 = vmatprep.subr.mxu0 0.0
    %291 = vmatpush2.msra.mxu0 0.0
    %292 = vmatprep.subr.mxu0 0.0
    %293 = vmatpush2.msra.mxu0 0.0
    %294 = vmatprep.subr.mxu0 0.0
    %295 = vmatpush2.msra.mxu0 0.0
    %296 = vmatprep.subr.mxu0 0.0
    %297 = vmatpush2.msra.mxu0 0.0
    %298 = vmatprep.subr.mxu0 0.0
    %299 = vmatpush2.msra.mxu0 0.0
    %300 = vmatprep.subr.mxu0 0.0
    %301 = vmatpush2.msra.mxu0 0.0
    %302 = vmatprep.subr.mxu0 0.0
    %303 = vmatpush2.msra.mxu0 0.0
    %304 = vmatprep.subr.mxu0 0.0
    %305 = vmatpush2.msra.mxu0 0.0
    %306 = vmatprep.subr.mxu0 0.0
    %307 = vmatpush2.msra.mxu0 0.0
    %308 = vmatprep.subr.mxu0 0.0
    %309 = vmatpush2.msra.mxu0 0.0
    %310 = vmatprep.subr.mxu0 0.0
    %311 = vmatpush2.msra.mxu0 0.0
    %312 = vmatprep.subr.mxu0 0.0
    %313 = vmatpush2.msra.mxu0 0.0
    %314 = vmatprep.subr.mxu0 0.0
    %315 = vmatpush2.msra.mxu0 0.0
    %316 = vmatprep.subr.mxu0 0.0
    %317 = vmatpush2.msra.mxu0 0.0
    %318 = vmatprep.subr.mxu0 0.0
    %319 = vmatpush2.msra.mxu0 0.0
    %320 = vmatprep.subr.mxu0 0.0
    %321 = vmatpush2.msra.mxu0 0.0
    %322 = vmatprep.mubr.f32.mxu0 0.0
    %323 = vmatmul.mubr.f32.gmra.mxu0 %v256
    %v324 = vpop.f32.mrf.mxu0
    %v325 = vadd.f32 0.0, %v324
    %v326 = vpop.f32.mrf.mxu0
    %327 = vdwg.mxu0
    %328 = vrot.lane.b32.xlu0 %v147, 120
    %v329 = vpop.permute.xlu0 %328
    %330 = vrot.lane.b32.xlu0 %v147, 88
    %v331 = vpop.permute.xlu0 %330
    %v332 = vsel %vm158, %v329, 0
    %v334 = vsel %vm158, %v331, 0
    %336 = vmatprep.subr.mxu0 0.0
    %337 = vmatpush1.xpose.msra.mxu0 0.0
    %338 = vmatprep.subr.mxu0 0.0
    %339 = vmatpush1.xpose.msra.mxu0 0.0
    %340 = vmatprep.subr.mxu0 0.0
    %341 = vmatpush1.xpose.msra.mxu0 0.0
    %342 = vmatprep.subr.mxu0 0.0
    %343 = vmatpush1.xpose.msra.mxu0 0.0
    %344 = vmatprep.subr.mxu0 0.0
    %345 = vmatpush1.xpose.msra.mxu0 0.0
    %346 = vmatprep.subr.mxu0 0.0
    %347 = vmatpush1.xpose.msra.mxu0 0.0
    %348 = vmatprep.subr.mxu0 0.0
    %349 = vmatpush1.xpose.msra.mxu0 0.0
    %350 = vmatprep.subr.mxu0 0.0
    %351 = vmatpush1.xpose.msra.mxu0 0.0
    %352 = vmatprep.subr.mxu0 0.0
    %353 = vmatpush1.xpose.msra.mxu0 0.0
    %354 = vmatprep.subr.mxu0 0.0
    %355 = vmatpush1.xpose.msra.mxu0 0.0
    %356 = vmatprep.subr.mxu0 0.0
    %357 = vmatpush1.xpose.msra.mxu0 0.0
    %358 = vmatprep.subr.mxu0 0.0
    %359 = vmatpush1.xpose.msra.mxu0 0.0
    %360 = vmatprep.subr.mxu0 0.0
    %361 = vmatpush1.xpose.msra.mxu0 0.0
    %362 = vmatprep.subr.mxu0 0.0
    %363 = vmatpush1.xpose.msra.mxu0 0.0
    %364 = vmatprep.subr.mxu0 0.0
    %365 = vmatpush1.xpose.msra.mxu0 0.0
    %366 = vmatprep.subr.mxu0 0.0
    %367 = vmatpush1.xpose.msra.mxu0 %v334
    %368 = vmatprep.subr.mxu0 0.0
    %369 = vmatpush2.xpose.msra.mxu0 0.0
    %370 = vmatprep.subr.mxu0 0.0
    %371 = vmatpush2.xpose.msra.mxu0 0.0
    %372 = vmatprep.subr.mxu0 0.0
    %373 = vmatpush2.xpose.msra.mxu0 0.0
    %374 = vmatprep.subr.mxu0 0.0
    %375 = vmatpush2.xpose.msra.mxu0 0.0
    %376 = vmatprep.subr.mxu0 0.0
    %377 = vmatpush2.xpose.msra.mxu0 0.0
    %378 = vmatprep.subr.mxu0 0.0
    %379 = vmatpush2.xpose.msra.mxu0 0.0
    %380 = vmatprep.subr.mxu0 0.0
    %381 = vmatpush2.xpose.msra.mxu0 0.0
    %382 = vmatprep.subr.mxu0 0.0
    %383 = vmatpush2.xpose.msra.mxu0 0.0
    %384 = vmatprep.subr.mxu0 0.0
    %385 = vmatpush2.xpose.msra.mxu0 0.0
    %386 = vmatprep.subr.mxu0 0.0
    %387 = vmatpush2.xpose.msra.mxu0 0.0
    %388 = vmatprep.subr.mxu0 0.0
    %389 = vmatpush2.xpose.msra.mxu0 0.0
    %390 = vmatprep.subr.mxu0 0.0
    %391 = vmatpush2.xpose.msra.mxu0 0.0
    %392 = vmatprep.subr.mxu0 0.0
    %393 = vmatpush2.xpose.msra.mxu0 0.0
    %394 = vmatprep.subr.mxu0 0.0
    %395 = vmatpush2.xpose.msra.mxu0 0.0
    %396 = vmatprep.subr.mxu0 0.0
    %397 = vmatpush2.xpose.msra.mxu0 0.0
    %398 = vmatprep.subr.mxu0 0.0
    %399 = vmatpush2.xpose.msra.mxu0 0.0
    %400 = vmatprep.mubr.f32.mxu0 0.0
    %401 = vmatmul.mubr.f32.gmra.mxu0 %v332
    %v402 = vpop.f32.mrf.mxu0
    %v403 = vadd.f32 0.0, %v402
    %v404 = vpop.f32.mrf.mxu0
    %405 = vdwg.mxu0
    %v406 = vsel %vm239, %v403, -1e+09
    %v407 = vsel %vm158, %v406, -inf
    %408 = vmax.xlane.f32.xlu0 %v407
    %v409 = vpop.xlane.xlu0 %408
    %v410 = vsub.f32 %v406, %v409
    %v411 = vmul.f32 %v410, 1.442695
    %v412 = vpow.pop %v411
    %v413 = vsel %vm158, %v412, 0.0
    %414 = vadd.xlane.f32.xlu0 %v413
    %v415 = vpop.xlane.xlu0 %414
    %v416 = vrcp.pop %v415
    %v417 = vmul.f32 %v412, %v416
    %418 = vrot.lane.b32.xlu0 %v147, 56
    %v419 = vpop.permute.xlu0 %418
    %v422 = vsel %vm158, %v417, 0
    %424 = vmatprep.subr.mxu0 0.0
    %425 = vmatpush1.msra.mxu0 0.0
    %426 = vmatprep.subr.mxu0 0.0
    %427 = vmatpush1.msra.mxu0 0.0
    %428 = vmatprep.subr.mxu0 0.0
    %429 = vmatpush1.msra.mxu0 0.0
    %430 = vmatprep.subr.mxu0 0.0
    %431 = vmatpush1.msra.mxu0 0.0
    %432 = vmatprep.subr.mxu0 0.0
    %433 = vmatpush1.msra.mxu0 0.0
    %434 = vmatprep.subr.mxu0 0.0
    %435 = vmatpush1.msra.mxu0 0.0
    %436 = vmatprep.subr.mxu0 0.0
    %437 = vmatpush1.msra.mxu0 0.0
    %438 = vmatprep.subr.mxu0 0.0
    %439 = vmatpush1.msra.mxu0 0.0
    %440 = vmatprep.subr.mxu0 0.0
    %441 = vmatpush1.msra.mxu0 0.0
    %442 = vmatprep.subr.mxu0 0.0
    %443 = vmatpush1.msra.mxu0 0.0
    %444 = vmatprep.subr.mxu0 0.0
    %445 = vmatpush1.msra.mxu0 0.0
    %446 = vmatprep.subr.mxu0 0.0
    %447 = vmatpush1.msra.mxu0 0.0
    %448 = vmatprep.subr.mxu0 0.0
    %449 = vmatpush1.msra.mxu0 0.0
    %450 = vmatprep.subr.mxu0 0.0
    %451 = vmatpush1.msra.mxu0 0.0
    %452 = vmatprep.subr.mxu0 0.0
    %453 = vmatpush1.msra.mxu0 0.0
    %454 = vmatprep.subr.mxu0 0.0
    %455 = vmatpush1.msra.mxu0 %v419
    %456 = vmatprep.subr.mxu0 0.0
    %457 = vmatpush2.msra.mxu0 0.0
    %458 = vmatprep.subr.mxu0 0.0
    %459 = vmatpush2.msra.mxu0 0.0
    %460 = vmatprep.subr.mxu0 0.0
    %461 = vmatpush2.msra.mxu0 0.0
    %462 = vmatprep.subr.mxu0 0.0
    %463 = vmatpush2.msra.mxu0 0.0
    %464 = vmatprep.subr.mxu0 0.0
    %465 = vmatpush2.msra.mxu0 0.0
    %466 = vmatprep.subr.mxu0 0.0
    %467 = vmatpush2.msra.mxu0 0.0
    %468 = vmatprep.subr.mxu0 0.0
    %469 = vmatpush2.msra.mxu0 0.0
    %470 = vmatprep.subr.mxu0 0.0
    %471 = vmatpush2.msra.mxu0 0.0
    %472 = vmatprep.subr.mxu0 0.0
    %473 = vmatpush2.msra.mxu0 0.0
    %474 = vmatprep.subr.mxu0 0.0
    %475 = vmatpush2.msra.mxu0 0.0
    %476 = vmatprep.subr.mxu0 0.0
    %477 = vmatpush2.msra.mxu0 0.0
    %478 = vmatprep.subr.mxu0 0.0
    %479 = vmatpush2.msra.mxu0 0.0
    %480 = vmatprep.subr.mxu0 0.0
    %481 = vmatpush2.msra.mxu0 0.0
    %482 = vmatprep.subr.mxu0 0.0
    %483 = vmatpush2.msra.mxu0 0.0
    %484 = vmatprep.subr.mxu0 0.0
    %485 = vmatpush2.msra.mxu0 0.0
    %486 = vmatprep.subr.mxu0 0.0
    %487 = vmatpush2.msra.mxu0 0.0
    %488 = vmatprep.mubr.f32.mxu0 0.0
    %489 = vmatmul.mubr.f32.gmra.mxu0 %v422
    %v490 = vpop.f32.mrf.mxu0
    %v491 = vadd.f32 0.0, %v490
    %v492 = vpop.f32.mrf.mxu0
    %493 = vdwg.mxu0
    %494 = vrot.lane.b32.xlu0 %v147, 112
    %v495 = vpop.permute.xlu0 %494
    %496 = vrot.lane.b32.xlu0 %v147, 80
    %v497 = vpop.permute.xlu0 %496
    %v498 = vsel %vm158, %v495, 0
    %v500 = vsel %vm158, %v497, 0
    %502 = vmatprep.subr.mxu0 0.0
    %503 = vmatpush1.xpose.msra.mxu0 0.0
    %504 = vmatprep.subr.mxu0 0.0
    %505 = vmatpush1.xpose.msra.mxu0 0.0
    %506 = vmatprep.subr.mxu0 0.0
    %507 = vmatpush1.xpose.msra.mxu0 0.0
    %508 = vmatprep.subr.mxu0 0.0
    %509 = vmatpush1.xpose.msra.mxu0 0.0
    %510 = vmatprep.subr.mxu0 0.0
    %511 = vmatpush1.xpose.msra.mxu0 0.0
    %512 = vmatprep.subr.mxu0 0.0
    %513 = vmatpush1.xpose.msra.mxu0 0.0
    %514 = vmatprep.subr.mxu0 0.0
    %515 = vmatpush1.xpose.msra.mxu0 0.0
    %516 = vmatprep.subr.mxu0 0.0
    %517 = vmatpush1.xpose.msra.mxu0 0.0
    %518 = vmatprep.subr.mxu0 0.0
    %519 = vmatpush1.xpose.msra.mxu0 0.0
    %520 = vmatprep.subr.mxu0 0.0
    %521 = vmatpush1.xpose.msra.mxu0 0.0
    %522 = vmatprep.subr.mxu0 0.0
    %523 = vmatpush1.xpose.msra.mxu0 0.0
    %524 = vmatprep.subr.mxu0 0.0
    %525 = vmatpush1.xpose.msra.mxu0 0.0
    %526 = vmatprep.subr.mxu0 0.0
    %527 = vmatpush1.xpose.msra.mxu0 0.0
    %528 = vmatprep.subr.mxu0 0.0
    %529 = vmatpush1.xpose.msra.mxu0 0.0
    %530 = vmatprep.subr.mxu0 0.0
    %531 = vmatpush1.xpose.msra.mxu0 0.0
    %532 = vmatprep.subr.mxu0 0.0
    %533 = vmatpush1.xpose.msra.mxu0 %v500
    %534 = vmatprep.subr.mxu0 0.0
    %535 = vmatpush2.xpose.msra.mxu0 0.0
    %536 = vmatprep.subr.mxu0 0.0
    %537 = vmatpush2.xpose.msra.mxu0 0.0
    %538 = vmatprep.subr.mxu0 0.0
    %539 = vmatpush2.xpose.msra.mxu0 0.0
    %540 = vmatprep.subr.mxu0 0.0
    %541 = vmatpush2.xpose.msra.mxu0 0.0
    %542 = vmatprep.subr.mxu0 0.0
    %543 = vmatpush2.xpose.msra.mxu0 0.0
    %544 = vmatprep.subr.mxu0 0.0
    %545 = vmatpush2.xpose.msra.mxu0 0.0
    %546 = vmatprep.subr.mxu0 0.0
    %547 = vmatpush2.xpose.msra.mxu0 0.0
    %548 = vmatprep.subr.mxu0 0.0
    %549 = vmatpush2.xpose.msra.mxu0 0.0
    %550 = vmatprep.subr.mxu0 0.0
    %551 = vmatpush2.xpose.msra.mxu0 0.0
    %552 = vmatprep.subr.mxu0 0.0
    %553 = vmatpush2.xpose.msra.mxu0 0.0
    %554 = vmatprep.subr.mxu0 0.0
    %555 = vmatpush2.xpose.msra.mxu0 0.0
    %556 = vmatprep.subr.mxu0 0.0
    %557 = vmatpush2.xpose.msra.mxu0 0.0
    %558 = vmatprep.subr.mxu0 0.0
    %559 = vmatpush2.xpose.msra.mxu0 0.0
    %560 = vmatprep.subr.mxu0 0.0
    %561 = vmatpush2.xpose.msra.mxu0 0.0
    %562 = vmatprep.subr.mxu0 0.0
    %563 = vmatpush2.xpose.msra.mxu0 0.0
    %564 = vmatprep.subr.mxu0 0.0
    %565 = vmatpush2.xpose.msra.mxu0 0.0
    %566 = vmatprep.mubr.f32.mxu0 0.0
    %567 = vmatmul.mubr.f32.gmra.mxu0 %v498
    %v568 = vpop.f32.mrf.mxu0
    %v569 = vadd.f32 0.0, %v568
    %v570 = vpop.f32.mrf.mxu0
    %571 = vdwg.mxu0
    %v572 = vsel %vm239, %v569, -1e+09
    %v573 = vsel %vm158, %v572, -inf
    %574 = vmax.xlane.f32.xlu0 %v573
    %v575 = vpop.xlane.xlu0 %574
    %v576 = vsub.f32 %v572, %v575
    %v577 = vmul.f32 %v576, 1.442695
    %v578 = vpow.pop %v577
    %v579 = vsel %vm158, %v578, 0.0
    %580 = vadd.xlane.f32.xlu0 %v579
    %v581 = vpop.xlane.xlu0 %580
    %v582 = vrcp.pop %v581
    %v583 = vmul.f32 %v578, %v582
    %584 = vrot.lane.b32.xlu0 %v147, 48
    %v585 = vpop.permute.xlu0 %584
    %v588 = vsel %vm158, %v583, 0
    %590 = vmatprep.subr.mxu0 0.0
    %591 = vmatpush1.msra.mxu0 0.0
    %592 = vmatprep.subr.mxu0 0.0
    %593 = vmatpush1.msra.mxu0 0.0
    %594 = vmatprep.subr.mxu0 0.0
    %595 = vmatpush1.msra.mxu0 0.0
    %596 = vmatprep.subr.mxu0 0.0
    %597 = vmatpush1.msra.mxu0 0.0
    %598 = vmatprep.subr.mxu0 0.0
    %599 = vmatpush1.msra.mxu0 0.0
    %600 = vmatprep.subr.mxu0 0.0
    %601 = vmatpush1.msra.mxu0 0.0
    %602 = vmatprep.subr.mxu0 0.0
    %603 = vmatpush1.msra.mxu0 0.0
    %604 = vmatprep.subr.mxu0 0.0
    %605 = vmatpush1.msra.mxu0 0.0
    %606 = vmatprep.subr.mxu0 0.0
    %607 = vmatpush1.msra.mxu0 0.0
    %608 = vmatprep.subr.mxu0 0.0
    %609 = vmatpush1.msra.mxu0 0.0
    %610 = vmatprep.subr.mxu0 0.0
    %611 = vmatpush1.msra.mxu0 0.0
    %612 = vmatprep.subr.mxu0 0.0
    %613 = vmatpush1.msra.mxu0 0.0
    %614 = vmatprep.subr.mxu0 0.0
    %615 = vmatpush1.msra.mxu0 0.0
    %616 = vmatprep.subr.mxu0 0.0
    %617 = vmatpush1.msra.mxu0 0.0
    %618 = vmatprep.subr.mxu0 0.0
    %619 = vmatpush1.msra.mxu0 0.0
    %620 = vmatprep.subr.mxu0 0.0
    %621 = vmatpush1.msra.mxu0 %v585
    %622 = vmatprep.subr.mxu0 0.0
    %623 = vmatpush2.msra.mxu0 0.0
    %624 = vmatprep.subr.mxu0 0.0
    %625 = vmatpush2.msra.mxu0 0.0
    %626 = vmatprep.subr.mxu0 0.0
    %627 = vmatpush2.msra.mxu0 0.0
    %628 = vmatprep.subr.mxu0 0.0
    %629 = vmatpush2.msra.mxu0 0.0
    %630 = vmatprep.subr.mxu0 0.0
    %631 = vmatpush2.msra.mxu0 0.0
    %632 = vmatprep.subr.mxu0 0.0
    %633 = vmatpush2.msra.mxu0 0.0
    %634 = vmatprep.subr.mxu0 0.0
    %635 = vmatpush2.msra.mxu0 0.0
    %636 = vmatprep.subr.mxu0 0.0
    %637 = vmatpush2.msra.mxu0 0.0
    %638 = vmatprep.subr.mxu0 0.0
    %639 = vmatpush2.msra.mxu0 0.0
    %640 = vmatprep.subr.mxu0 0.0
    %641 = vmatpush2.msra.mxu0 0.0
    %642 = vmatprep.subr.mxu0 0.0
    %643 = vmatpush2.msra.mxu0 0.0
    %644 = vmatprep.subr.mxu0 0.0
    %645 = vmatpush2.msra.mxu0 0.0
    %646 = vmatprep.subr.mxu0 0.0
    %647 = vmatpush2.msra.mxu0 0.0
    %648 = vmatprep.subr.mxu0 0.0
    %649 = vmatpush2.msra.mxu0 0.0
    %650 = vmatprep.subr.mxu0 0.0
    %651 = vmatpush2.msra.mxu0 0.0
    %652 = vmatprep.subr.mxu0 0.0
    %653 = vmatpush2.msra.mxu0 0.0
    %654 = vmatprep.mubr.f32.mxu0 0.0
    %655 = vmatmul.mubr.f32.gmra.mxu0 %v588
    %v656 = vpop.f32.mrf.mxu0
    %v657 = vadd.f32 0.0, %v656
    %v658 = vpop.f32.mrf.mxu0
    %659 = vdwg.mxu0
    %660 = vrot.lane.b32.xlu0 %v147, 104
    %v661 = vpop.permute.xlu0 %660
    %662 = vrot.lane.b32.xlu0 %v147, 72
    %v663 = vpop.permute.xlu0 %662
    %v664 = vsel %vm158, %v661, 0
    %v666 = vsel %vm158, %v663, 0
    %668 = vmatprep.subr.mxu0 0.0
    %669 = vmatpush1.xpose.msra.mxu0 0.0
    %670 = vmatprep.subr.mxu0 0.0
    %671 = vmatpush1.xpose.msra.mxu0 0.0
    %672 = vmatprep.subr.mxu0 0.0
    %673 = vmatpush1.xpose.msra.mxu0 0.0
    %674 = vmatprep.subr.mxu0 0.0
    %675 = vmatpush1.xpose.msra.mxu0 0.0
    %676 = vmatprep.subr.mxu0 0.0
    %677 = vmatpush1.xpose.msra.mxu0 0.0
    %678 = vmatprep.subr.mxu0 0.0
    %679 = vmatpush1.xpose.msra.mxu0 0.0
    %680 = vmatprep.subr.mxu0 0.0
    %681 = vmatpush1.xpose.msra.mxu0 0.0
    %682 = vmatprep.subr.mxu0 0.0
    %683 = vmatpush1.xpose.msra.mxu0 0.0
    %684 = vmatprep.subr.mxu0 0.0
    %685 = vmatpush1.xpose.msra.mxu0 0.0
    %686 = vmatprep.subr.mxu0 0.0
    %687 = vmatpush1.xpose.msra.mxu0 0.0
    %688 = vmatprep.subr.mxu0 0.0
    %689 = vmatpush1.xpose.msra.mxu0 0.0
    %690 = vmatprep.subr.mxu0 0.0
    %691 = vmatpush1.xpose.msra.mxu0 0.0
    %692 = vmatprep.subr.mxu0 0.0
    %693 = vmatpush1.xpose.msra.mxu0 0.0
    %694 = vmatprep.subr.mxu0 0.0
    %695 = vmatpush1.xpose.msra.mxu0 0.0
    %696 = vmatprep.subr.mxu0 0.0
    %697 = vmatpush1.xpose.msra.mxu0 0.0
    %698 = vmatprep.subr.mxu0 0.0
    %699 = vmatpush1.xpose.msra.mxu0 %v666
    %700 = vmatprep.subr.mxu0 0.0
    %701 = vmatpush2.xpose.msra.mxu0 0.0
    %702 = vmatprep.subr.mxu0 0.0
    %703 = vmatpush2.xpose.msra.mxu0 0.0
    %704 = vmatprep.subr.mxu0 0.0
    %705 = vmatpush2.xpose.msra.mxu0 0.0
    %706 = vmatprep.subr.mxu0 0.0
    %707 = vmatpush2.xpose.msra.mxu0 0.0
    %708 = vmatprep.subr.mxu0 0.0
    %709 = vmatpush2.xpose.msra.mxu0 0.0
    %710 = vmatprep.subr.mxu0 0.0
    %711 = vmatpush2.xpose.msra.mxu0 0.0
    %712 = vmatprep.subr.mxu0 0.0
    %713 = vmatpush2.xpose.msra.mxu0 0.0
    %714 = vmatprep.subr.mxu0 0.0
    %715 = vmatpush2.xpose.msra.mxu0 0.0
    %716 = vmatprep.subr.mxu0 0.0
    %717 = vmatpush2.xpose.msra.mxu0 0.0
    %718 = vmatprep.subr.mxu0 0.0
    %719 = vmatpush2.xpose.msra.mxu0 0.0
    %720 = vmatprep.subr.mxu0 0.0
    %721 = vmatpush2.xpose.msra.mxu0 0.0
    %722 = vmatprep.subr.mxu0 0.0
    %723 = vmatpush2.xpose.msra.mxu0 0.0
    %724 = vmatprep.subr.mxu0 0.0
    %725 = vmatpush2.xpose.msra.mxu0 0.0
    %726 = vmatprep.subr.mxu0 0.0
    %727 = vmatpush2.xpose.msra.mxu0 0.0
    %728 = vmatprep.subr.mxu0 0.0
    %729 = vmatpush2.xpose.msra.mxu0 0.0
    %730 = vmatprep.subr.mxu0 0.0
    %731 = vmatpush2.xpose.msra.mxu0 0.0
    %732 = vmatprep.mubr.f32.mxu0 0.0
    %733 = vmatmul.mubr.f32.gmra.mxu0 %v664
    %v734 = vpop.f32.mrf.mxu0
    %v735 = vadd.f32 0.0, %v734
    %v736 = vpop.f32.mrf.mxu0
    %737 = vdwg.mxu0
    %v738 = vsel %vm239, %v735, -1e+09
    %v739 = vsel %vm158, %v738, -inf
    %740 = vmax.xlane.f32.xlu0 %v739
    %v741 = vpop.xlane.xlu0 %740
    %v742 = vsub.f32 %v738, %v741
    %v743 = vmul.f32 %v742, 1.442695
    %v744 = vpow.pop %v743
    %v745 = vsel %vm158, %v744, 0.0
    %746 = vadd.xlane.f32.xlu0 %v745
    %v747 = vpop.xlane.xlu0 %746
    %v748 = vrcp.pop %v747
    %v749 = vmul.f32 %v744, %v748
    %750 = vrot.lane.b32.xlu0 %v147, 40
    %v751 = vpop.permute.xlu0 %750
    %v754 = vsel %vm158, %v749, 0
    %756 = vmatprep.subr.mxu0 0.0
    %757 = vmatpush1.msra.mxu0 0.0
    %758 = vmatprep.subr.mxu0 0.0
    %759 = vmatpush1.msra.mxu0 0.0
    %760 = vmatprep.subr.mxu0 0.0
    %761 = vmatpush1.msra.mxu0 0.0
    %762 = vmatprep.subr.mxu0 0.0
    %763 = vmatpush1.msra.mxu0 0.0
    %764 = vmatprep.subr.mxu0 0.0
    %765 = vmatpush1.msra.mxu0 0.0
    %766 = vmatprep.subr.mxu0 0.0
    %767 = vmatpush1.msra.mxu0 0.0
    %768 = vmatprep.subr.mxu0 0.0
    %769 = vmatpush1.msra.mxu0 0.0
    %770 = vmatprep.subr.mxu0 0.0
    %771 = vmatpush1.msra.mxu0 0.0
    %772 = vmatprep.subr.mxu0 0.0
    %773 = vmatpush1.msra.mxu0 0.0
    %774 = vmatprep.subr.mxu0 0.0
    %775 = vmatpush1.msra.mxu0 0.0
    %776 = vmatprep.subr.mxu0 0.0
    %777 = vmatpush1.msra.mxu0 0.0
    %778 = vmatprep.subr.mxu0 0.0
    %779 = vmatpush1.msra.mxu0 0.0
    %780 = vmatprep.subr.mxu0 0.0
    %781 = vmatpush1.msra.mxu0 0.0
    %782 = vmatprep.subr.mxu0 0.0
    %783 = vmatpush1.msra.mxu0 0.0
    %784 = vmatprep.subr.mxu0 0.0
    %785 = vmatpush1.msra.mxu0 0.0
    %786 = vmatprep.subr.mxu0 0.0
    %787 = vmatpush1.msra.mxu0 %v751
    %788 = vmatprep.subr.mxu0 0.0
    %789 = vmatpush2.msra.mxu0 0.0
    %790 = vmatprep.subr.mxu0 0.0
    %791 = vmatpush2.msra.mxu0 0.0
    %792 = vmatprep.subr.mxu0 0.0
    %793 = vmatpush2.msra.mxu0 0.0
    %794 = vmatprep.subr.mxu0 0.0
    %795 = vmatpush2.msra.mxu0 0.0
    %796 = vmatprep.subr.mxu0 0.0
    %797 = vmatpush2.msra.mxu0 0.0
    %798 = vmatprep.subr.mxu0 0.0
    %799 = vmatpush2.msra.mxu0 0.0
    %800 = vmatprep.subr.mxu0 0.0
    %801 = vmatpush2.msra.mxu0 0.0
    %802 = vmatprep.subr.mxu0 0.0
    %803 = vmatpush2.msra.mxu0 0.0
    %804 = vmatprep.subr.mxu0 0.0
    %805 = vmatpush2.msra.mxu0 0.0
    %806 = vmatprep.subr.mxu0 0.0
    %807 = vmatpush2.msra.mxu0 0.0
    %808 = vmatprep.subr.mxu0 0.0
    %809 = vmatpush2.msra.mxu0 0.0
    %810 = vmatprep.subr.mxu0 0.0
    %811 = vmatpush2.msra.mxu0 0.0
    %812 = vmatprep.subr.mxu0 0.0
    %813 = vmatpush2.msra.mxu0 0.0
    %814 = vmatprep.subr.mxu0 0.0
    %815 = vmatpush2.msra.mxu0 0.0
    %816 = vmatprep.subr.mxu0 0.0
    %817 = vmatpush2.msra.mxu0 0.0
    %818 = vmatprep.subr.mxu0 0.0
    %819 = vmatpush2.msra.mxu0 0.0
    %820 = vmatprep.mubr.f32.mxu0 0.0
    %821 = vmatmul.mubr.f32.gmra.mxu0 %v754
    %v822 = vpop.f32.mrf.mxu0
    %v823 = vadd.f32 0.0, %v822
    %v824 = vpop.f32.mrf.mxu0
    %825 = vdwg.mxu0
    %827 = vrot.lane.b32.xlu0 %v491, 8
    %v828 = vpop.permute.xlu0 %827
    %831 = vrot.lane.b32.xlu0 %v657, 16
    %v832 = vpop.permute.xlu0 %831
    %835 = vrot.lane.b32.xlu0 %v823, 24
    %v836 = vpop.permute.xlu0 %835
    %v838 = vsel %vm158, %v325, %v828
    %vm839 = vcmask 130048
    %v840 = vsel %vm839, %v838, %v832
    %vm841 = vcmask 195584
    %v842 = vsel %vm841, %v840, %v836
    %844 = vrot.lane.b32.xlu0 %v152, 96
    %v845 = vpop.permute.xlu0 %844
    %v846 = vsel %vm158, %v152, 0
    %v848 = vsel %vm158, %v845, 0
    %850 = vmatprep.subr.mxu0 0.0
    %851 = vmatpush1.xpose.msra.mxu0 0.0
    %852 = vmatprep.subr.mxu0 0.0
    %853 = vmatpush1.xpose.msra.mxu0 0.0
    %854 = vmatprep.subr.mxu0 0.0
    %855 = vmatpush1.xpose.msra.mxu0 0.0
    %856 = vmatprep.subr.mxu0 0.0
    %857 = vmatpush1.xpose.msra.mxu0 0.0
    %858 = vmatprep.subr.mxu0 0.0
    %859 = vmatpush1.xpose.msra.mxu0 0.0
    %860 = vmatprep.subr.mxu0 0.0
    %861 = vmatpush1.xpose.msra.mxu0 0.0
    %862 = vmatprep.subr.mxu0 0.0
    %863 = vmatpush1.xpose.msra.mxu0 0.0
    %864 = vmatprep.subr.mxu0 0.0
    %865 = vmatpush1.xpose.msra.mxu0 0.0
    %866 = vmatprep.subr.mxu0 0.0
    %867 = vmatpush1.xpose.msra.mxu0 0.0
    %868 = vmatprep.subr.mxu0 0.0
    %869 = vmatpush1.xpose.msra.mxu0 0.0
    %870 = vmatprep.subr.mxu0 0.0
    %871 = vmatpush1.xpose.msra.mxu0 0.0
    %872 = vmatprep.subr.mxu0 0.0
    %873 = vmatpush1.xpose.msra.mxu0 0.0
    %874 = vmatprep.subr.mxu0 0.0
    %875 = vmatpush1.xpose.msra.mxu0 0.0
    %876 = vmatprep.subr.mxu0 0.0
    %877 = vmatpush1.xpose.msra.mxu0 0.0
    %878 = vmatprep.subr.mxu0 0.0
    %879 = vmatpush1.xpose.msra.mxu0 0.0
    %880 = vmatprep.subr.mxu0 0.0
    %881 = vmatpush1.xpose.msra.mxu0 %v848
    %882 = vmatprep.subr.mxu0 0.0
    %883 = vmatpush2.xpose.msra.mxu0 0.0
    %884 = vmatprep.subr.mxu0 0.0
    %885 = vmatpush2.xpose.msra.mxu0 0.0
    %886 = vmatprep.subr.mxu0 0.0
    %887 = vmatpush2.xpose.msra.mxu0 0.0
    %888 = vmatprep.subr.mxu0 0.0
    %889 = vmatpush2.xpose.msra.mxu0 0.0
    %890 = vmatprep.subr.mxu0 0.0
    %891 = vmatpush2.xpose.msra.mxu0 0.0
    %892 = vmatprep.subr.mxu0 0.0
    %893 = vmatpush2.xpose.msra.mxu0 0.0
    %894 = vmatprep.subr.mxu0 0.0
    %895 = vmatpush2.xpose.msra.mxu0 0.0
    %896 = vmatprep.subr.mxu0 0.0
    %897 = vmatpush2.xpose.msra.mxu0 0.0
    %898 = vmatprep.subr.mxu0 0.0
    %899 = vmatpush2.xpose.msra.mxu0 0.0
    %900 = vmatprep.subr.mxu0 0.0
    %901 = vmatpush2.xpose.msra.mxu0 0.0
    %902 = vmatprep.subr.mxu0 0.0
    %903 = vmatpush2.xpose.msra.mxu0 0.0
    %904 = vmatprep.subr.mxu0 0.0
    %905 = vmatpush2.xpose.msra.mxu0 0.0
    %906 = vmatprep.subr.mxu0 0.0
    %907 = vmatpush2.xpose.msra.mxu0 0.0
    %908 = vmatprep.subr.mxu0 0.0
    %909 = vmatpush2.xpose.msra.mxu0 0.0
    %910 = vmatprep.subr.mxu0 0.0
    %911 = vmatpush2.xpose.msra.mxu0 0.0
    %912 = vmatprep.subr.mxu0 0.0
    %913 = vmatpush2.xpose.msra.mxu0 0.0
    %914 = vmatprep.mubr.f32.mxu0 0.0
    %915 = vmatmul.mubr.f32.gmra.mxu0 %v846
    %v916 = vpop.f32.mrf.mxu0
    %v917 = vadd.f32 0.0, %v916
    %v918 = vpop.f32.mrf.mxu0
    %919 = vdwg.mxu0
    %921 = vrot.lane.b32.xlu0 %v917, 8
    %v922 = vpop.permute.xlu0 %921
    %v924 = vsel %vm239, %v922, -1e+09
    %vm925 = vcmask 130112
    %v926 = vsel %vm925, %v924, -inf
    %927 = vmax.xlane.f32.xlu0 %v926
    %v928 = vpop.xlane.xlu0 %927
    %v929 = vsub.f32 %v924, %v928
    %v930 = vmul.f32 %v929, 1.442695
    %v931 = vpow.pop %v930
    %933 = vrot.lane.b32.xlu0 %v931, 120
    %v934 = vpop.permute.xlu0 %933
    %v936 = vsel %vm158, %v934, 0.0
    %937 = vadd.xlane.f32.xlu0 %v936
    %v938 = vpop.xlane.xlu0 %937
    %v939 = vrcp.pop %v938
    %v940 = vmul.f32 %v931, %v939
    %942 = vrot.lane.b32.xlu0 %v940, 120
    %v943 = vpop.permute.xlu0 %942
    %944 = vrot.lane.b32.xlu0 %v152, 64
    %v945 = vpop.permute.xlu0 %944
    %v947 = vsel %vm158, %v943, 0
    %949 = vmatprep.subr.mxu0 0.0
    %950 = vmatpush1.msra.mxu0 0.0
    %951 = vmatprep.subr.mxu0 0.0
    %952 = vmatpush1.msra.mxu0 0.0
    %953 = vmatprep.subr.mxu0 0.0
    %954 = vmatpush1.msra.mxu0 0.0
    %955 = vmatprep.subr.mxu0 0.0
    %956 = vmatpush1.msra.mxu0 0.0
    %957 = vmatprep.subr.mxu0 0.0
    %958 = vmatpush1.msra.mxu0 0.0
    %959 = vmatprep.subr.mxu0 0.0
    %960 = vmatpush1.msra.mxu0 0.0
    %961 = vmatprep.subr.mxu0 0.0
    %962 = vmatpush1.msra.mxu0 0.0
    %963 = vmatprep.subr.mxu0 0.0
    %964 = vmatpush1.msra.mxu0 0.0
    %965 = vmatprep.subr.mxu0 0.0
    %966 = vmatpush1.msra.mxu0 0.0
    %967 = vmatprep.subr.mxu0 0.0
    %968 = vmatpush1.msra.mxu0 0.0
    %969 = vmatprep.subr.mxu0 0.0
    %970 = vmatpush1.msra.mxu0 0.0
    %971 = vmatprep.subr.mxu0 0.0
    %972 = vmatpush1.msra.mxu0 0.0
    %973 = vmatprep.subr.mxu0 0.0
    %974 = vmatpush1.msra.mxu0 0.0
    %975 = vmatprep.subr.mxu0 0.0
    %976 = vmatpush1.msra.mxu0 0.0
    %977 = vmatprep.subr.mxu0 0.0
    %978 = vmatpush1.msra.mxu0 0.0
    %979 = vmatprep.subr.mxu0 0.0
    %980 = vmatpush1.msra.mxu0 %v945
    %981 = vmatprep.subr.mxu0 0.0
    %982 = vmatpush2.msra.mxu0 0.0
    %983 = vmatprep.subr.mxu0 0.0
    %984 = vmatpush2.msra.mxu0 0.0
    %985 = vmatprep.subr.mxu0 0.0
    %986 = vmatpush2.msra.mxu0 0.0
    %987 = vmatprep.subr.mxu0 0.0
    %988 = vmatpush2.msra.mxu0 0.0
    %989 = vmatprep.subr.mxu0 0.0
    %990 = vmatpush2.msra.mxu0 0.0
    %991 = vmatprep.subr.mxu0 0.0
    %992 = vmatpush2.msra.mxu0 0.0
    %993 = vmatprep.subr.mxu0 0.0
    %994 = vmatpush2.msra.mxu0 0.0
    %995 = vmatprep.subr.mxu0 0.0
    %996 = vmatpush2.msra.mxu0 0.0
    %997 = vmatprep.subr.mxu0 0.0
    %998 = vmatpush2.msra.mxu0 0.0
    %999 = vmatprep.subr.mxu0 0.0
    %1000 = vmatpush2.msra.mxu0 0.0
    %1001 = vmatprep.subr.mxu0 0.0
    %1002 = vmatpush2.msra.mxu0 0.0
    %1003 = vmatprep.subr.mxu0 0.0
    %1004 = vmatpush2.msra.mxu0 0.0
    %1005 = vmatprep.subr.mxu0 0.0
    %1006 = vmatpush2.msra.mxu0 0.0
    %1007 = vmatprep.subr.mxu0 0.0
    %1008 = vmatpush2.msra.mxu0 0.0
    %1009 = vmatprep.subr.mxu0 0.0
    %1010 = vmatpush2.msra.mxu0 0.0
    %1011 = vmatprep.subr.mxu0 0.0
    %1012 = vmatpush2.msra.mxu0 0.0
    %1013 = vmatprep.mubr.f32.mxu0 0.0
    %1014 = vmatmul.mubr.f32.gmra.mxu0 %v947
    %v1015 = vpop.f32.mrf.mxu0
    %v1016 = vadd.f32 0.0, %v1015
    %v1017 = vpop.f32.mrf.mxu0
    %1018 = vdwg.mxu0
    %1019 = vrot.lane.b32.xlu0 %v152, 120
    %v1020 = vpop.permute.xlu0 %1019
    %1021 = vrot.lane.b32.xlu0 %v152, 88
    %v1022 = vpop.permute.xlu0 %1021
    %v1023 = vsel %vm158, %v1020, 0
    %v1025 = vsel %vm158, %v1022, 0
    %1027 = vmatprep.subr.mxu0 0.0
    %1028 = vmatpush1.xpose.msra.mxu0 0.0
    %1029 = vmatprep.subr.mxu0 0.0
    %1030 = vmatpush1.xpose.msra.mxu0 0.0
    %1031 = vmatprep.subr.mxu0 0.0
    %1032 = vmatpush1.xpose.msra.mxu0 0.0
    %1033 = vmatprep.subr.mxu0 0.0
    %1034 = vmatpush1.xpose.msra.mxu0 0.0
    %1035 = vmatprep.subr.mxu0 0.0
    %1036 = vmatpush1.xpose.msra.mxu0 0.0
    %1037 = vmatprep.subr.mxu0 0.0
    %1038 = vmatpush1.xpose.msra.mxu0 0.0
    %1039 = vmatprep.subr.mxu0 0.0
    %1040 = vmatpush1.xpose.msra.mxu0 0.0
    %1041 = vmatprep.subr.mxu0 0.0
    %1042 = vmatpush1.xpose.msra.mxu0 0.0
    %1043 = vmatprep.subr.mxu0 0.0
    %1044 = vmatpush1.xpose.msra.mxu0 0.0
    %1045 = vmatprep.subr.mxu0 0.0
    %1046 = vmatpush1.xpose.msra.mxu0 0.0
    %1047 = vmatprep.subr.mxu0 0.0
    %1048 = vmatpush1.xpose.msra.mxu0 0.0
    %1049 = vmatprep.subr.mxu0 0.0
    %1050 = vmatpush1.xpose.msra.mxu0 0.0
    %1051 = vmatprep.subr.mxu0 0.0
    %1052 = vmatpush1.xpose.msra.mxu0 0.0
    %1053 = vmatprep.subr.mxu0 0.0
    %1054 = vmatpush1.xpose.msra.mxu0 0.0
    %1055 = vmatprep.subr.mxu0 0.0
    %1056 = vmatpush1.xpose.msra.mxu0 0.0
    %1057 = vmatprep.subr.mxu0 0.0
    %1058 = vmatpush1.xpose.msra.mxu0 %v1025
    %1059 = vmatprep.subr.mxu0 0.0
    %1060 = vmatpush2.xpose.msra.mxu0 0.0
    %1061 = vmatprep.subr.mxu0 0.0
    %1062 = vmatpush2.xpose.msra.mxu0 0.0
    %1063 = vmatprep.subr.mxu0 0.0
    %1064 = vmatpush2.xpose.msra.mxu0 0.0
    %1065 = vmatprep.subr.mxu0 0.0
    %1066 = vmatpush2.xpose.msra.mxu0 0.0
    %1067 = vmatprep.subr.mxu0 0.0
    %1068 = vmatpush2.xpose.msra.mxu0 0.0
    %1069 = vmatprep.subr.mxu0 0.0
    %1070 = vmatpush2.xpose.msra.mxu0 0.0
    %1071 = vmatprep.subr.mxu0 0.0
    %1072 = vmatpush2.xpose.msra.mxu0 0.0
    %1073 = vmatprep.subr.mxu0 0.0
    %1074 = vmatpush2.xpose.msra.mxu0 0.0
    %1075 = vmatprep.subr.mxu0 0.0
    %1076 = vmatpush2.xpose.msra.mxu0 0.0
    %1077 = vmatprep.subr.mxu0 0.0
    %1078 = vmatpush2.xpose.msra.mxu0 0.0
    %1079 = vmatprep.subr.mxu0 0.0
    %1080 = vmatpush2.xpose.msra.mxu0 0.0
    %1081 = vmatprep.subr.mxu0 0.0
    %1082 = vmatpush2.xpose.msra.mxu0 0.0
    %1083 = vmatprep.subr.mxu0 0.0
    %1084 = vmatpush2.xpose.msra.mxu0 0.0
    %1085 = vmatprep.subr.mxu0 0.0
    %1086 = vmatpush2.xpose.msra.mxu0 0.0
    %1087 = vmatprep.subr.mxu0 0.0
    %1088 = vmatpush2.xpose.msra.mxu0 0.0
    %1089 = vmatprep.subr.mxu0 0.0
    %1090 = vmatpush2.xpose.msra.mxu0 0.0
    %1091 = vmatprep.mubr.f32.mxu0 0.0
    %1092 = vmatmul.mubr.f32.gmra.mxu0 %v1023
    %v1093 = vpop.f32.mrf.mxu0
    %v1094 = vadd.f32 0.0, %v1093
    %v1095 = vpop.f32.mrf.mxu0
    %1096 = vdwg.mxu0
    %1098 = vrot.lane.b32.xlu0 %v1094, 8
    %v1099 = vpop.permute.xlu0 %1098
    %v1101 = vsel %vm239, %v1099, -1e+09
    %v1102 = vsel %vm925, %v1101, -inf
    %1103 = vmax.xlane.f32.xlu0 %v1102
    %v1104 = vpop.xlane.xlu0 %1103
    %v1105 = vsub.f32 %v1101, %v1104
    %v1106 = vmul.f32 %v1105, 1.442695
    %v1107 = vpow.pop %v1106
    %1109 = vrot.lane.b32.xlu0 %v1107, 120
    %v1110 = vpop.permute.xlu0 %1109
    %v1112 = vsel %vm158, %v1110, 0.0
    %1113 = vadd.xlane.f32.xlu0 %v1112
    %v1114 = vpop.xlane.xlu0 %1113
    %v1115 = vrcp.pop %v1114
    %v1116 = vmul.f32 %v1107, %v1115
    %1118 = vrot.lane.b32.xlu0 %v1116, 120
    %v1119 = vpop.permute.xlu0 %1118
    %1120 = vrot.lane.b32.xlu0 %v152, 56
    %v1121 = vpop.permute.xlu0 %1120
    %v1123 = vsel %vm158, %v1119, 0
    %1125 = vmatprep.subr.mxu0 0.0
    %1126 = vmatpush1.msra.mxu0 0.0
    %1127 = vmatprep.subr.mxu0 0.0
    %1128 = vmatpush1.msra.mxu0 0.0
    %1129 = vmatprep.subr.mxu0 0.0
    %1130 = vmatpush1.msra.mxu0 0.0
    %1131 = vmatprep.subr.mxu0 0.0
    %1132 = vmatpush1.msra.mxu0 0.0
    %1133 = vmatprep.subr.mxu0 0.0
    %1134 = vmatpush1.msra.mxu0 0.0
    %1135 = vmatprep.subr.mxu0 0.0
    %1136 = vmatpush1.msra.mxu0 0.0
    %1137 = vmatprep.subr.mxu0 0.0
    %1138 = vmatpush1.msra.mxu0 0.0
    %1139 = vmatprep.subr.mxu0 0.0
    %1140 = vmatpush1.msra.mxu0 0.0
    %1141 = vmatprep.subr.mxu0 0.0
    %1142 = vmatpush1.msra.mxu0 0.0
    %1143 = vmatprep.subr.mxu0 0.0
    %1144 = vmatpush1.msra.mxu0 0.0
    %1145 = vmatprep.subr.mxu0 0.0
    %1146 = vmatpush1.msra.mxu0 0.0
    %1147 = vmatprep.subr.mxu0 0.0
    %1148 = vmatpush1.msra.mxu0 0.0
    %1149 = vmatprep.subr.mxu0 0.0
    %1150 = vmatpush1.msra.mxu0 0.0
    %1151 = vmatprep.subr.mxu0 0.0
    %1152 = vmatpush1.msra.mxu0 0.0
    %1153 = vmatprep.subr.mxu0 0.0
    %1154 = vmatpush1.msra.mxu0 0.0
    %1155 = vmatprep.subr.mxu0 0.0
    %1156 = vmatpush1.msra.mxu0 %v1121
    %1157 = vmatprep.subr.mxu0 0.0
    %1158 = vmatpush2.msra.mxu0 0.0
    %1159 = vmatprep.subr.mxu0 0.0
    %1160 = vmatpush2.msra.mxu0 0.0
    %1161 = vmatprep.subr.mxu0 0.0
    %1162 = vmatpush2.msra.mxu0 0.0
    %1163 = vmatprep.subr.mxu0 0.0
    %1164 = vmatpush2.msra.mxu0 0.0
    %1165 = vmatprep.subr.mxu0 0.0
    %1166 = vmatpush2.msra.mxu0 0.0
    %1167 = vmatprep.subr.mxu0 0.0
    %1168 = vmatpush2.msra.mxu0 0.0
    %1169 = vmatprep.subr.mxu0 0.0
    %1170 = vmatpush2.msra.mxu0 0.0
    %1171 = vmatprep.subr.mxu0 0.0
    %1172 = vmatpush2.msra.mxu0 0.0
    %1173 = vmatprep.subr.mxu0 0.0
    %1174 = vmatpush2.msra.mxu0 0.0
    %1175 = vmatprep.subr.mxu0 0.0
    %1176 = vmatpush2.msra.mxu0 0.0
    %1177 = vmatprep.subr.mxu0 0.0
    %1178 = vmatpush2.msra.mxu0 0.0
    %1179 = vmatprep.subr.mxu0 0.0
    %1180 = vmatpush2.msra.mxu0 0.0
    %1181 = vmatprep.subr.mxu0 0.0
    %1182 = vmatpush2.msra.mxu0 0.0
    %1183 = vmatprep.subr.mxu0 0.0
    %1184 = vmatpush2.msra.mxu0 0.0
    %1185 = vmatprep.subr.mxu0 0.0
    %1186 = vmatpush2.msra.mxu0 0.0
    %1187 = vmatprep.subr.mxu0 0.0
    %1188 = vmatpush2.msra.mxu0 0.0
    %1189 = vmatprep.mubr.f32.mxu0 0.0
    %1190 = vmatmul.mubr.f32.gmra.mxu0 %v1123
    %v1191 = vpop.f32.mrf.mxu0
    %v1192 = vadd.f32 0.0, %v1191
    %v1193 = vpop.f32.mrf.mxu0
    %1194 = vdwg.mxu0
    %1195 = vrot.lane.b32.xlu0 %v152, 112
    %v1196 = vpop.permute.xlu0 %1195
    %1197 = vrot.lane.b32.xlu0 %v152, 80
    %v1198 = vpop.permute.xlu0 %1197
    %v1199 = vsel %vm158, %v1196, 0
    %v1201 = vsel %vm158, %v1198, 0
    %1203 = vmatprep.subr.mxu0 0.0
    %1204 = vmatpush1.xpose.msra.mxu0 0.0
    %1205 = vmatprep.subr.mxu0 0.0
    %1206 = vmatpush1.xpose.msra.mxu0 0.0
    %1207 = vmatprep.subr.mxu0 0.0
    %1208 = vmatpush1.xpose.msra.mxu0 0.0
    %1209 = vmatprep.subr.mxu0 0.0
    %1210 = vmatpush1.xpose.msra.mxu0 0.0
    %1211 = vmatprep.subr.mxu0 0.0
    %1212 = vmatpush1.xpose.msra.mxu0 0.0
    %1213 = vmatprep.subr.mxu0 0.0
    %1214 = vmatpush1.xpose.msra.mxu0 0.0
    %1215 = vmatprep.subr.mxu0 0.0
    %1216 = vmatpush1.xpose.msra.mxu0 0.0
    %1217 = vmatprep.subr.mxu0 0.0
    %1218 = vmatpush1.xpose.msra.mxu0 0.0
    %1219 = vmatprep.subr.mxu0 0.0
    %1220 = vmatpush1.xpose.msra.mxu0 0.0
    %1221 = vmatprep.subr.mxu0 0.0
    %1222 = vmatpush1.xpose.msra.mxu0 0.0
    %1223 = vmatprep.subr.mxu0 0.0
    %1224 = vmatpush1.xpose.msra.mxu0 0.0
    %1225 = vmatprep.subr.mxu0 0.0
    %1226 = vmatpush1.xpose.msra.mxu0 0.0
    %1227 = vmatprep.subr.mxu0 0.0
    %1228 = vmatpush1.xpose.msra.mxu0 0.0
    %1229 = vmatprep.subr.mxu0 0.0
    %1230 = vmatpush1.xpose.msra.mxu0 0.0
    %1231 = vmatprep.subr.mxu0 0.0
    %1232 = vmatpush1.xpose.msra.mxu0 0.0
    %1233 = vmatprep.subr.mxu0 0.0
    %1234 = vmatpush1.xpose.msra.mxu0 %v1201
    %1235 = vmatprep.subr.mxu0 0.0
    %1236 = vmatpush2.xpose.msra.mxu0 0.0
    %1237 = vmatprep.subr.mxu0 0.0
    %1238 = vmatpush2.xpose.msra.mxu0 0.0
    %1239 = vmatprep.subr.mxu0 0.0
    %1240 = vmatpush2.xpose.msra.mxu0 0.0
    %1241 = vmatprep.subr.mxu0 0.0
    %1242 = vmatpush2.xpose.msra.mxu0 0.0
    %1243 = vmatprep.subr.mxu0 0.0
    %1244 = vmatpush2.xpose.msra.mxu0 0.0
    %1245 = vmatprep.subr.mxu0 0.0
    %1246 = vmatpush2.xpose.msra.mxu0 0.0
    %1247 = vmatprep.subr.mxu0 0.0
    %1248 = vmatpush2.xpose.msra.mxu0 0.0
    %1249 = vmatprep.subr.mxu0 0.0
    %1250 = vmatpush2.xpose.msra.mxu0 0.0
    %1251 = vmatprep.subr.mxu0 0.0
    %1252 = vmatpush2.xpose.msra.mxu0 0.0
    %1253 = vmatprep.subr.mxu0 0.0
    %1254 = vmatpush2.xpose.msra.mxu0 0.0
    %1255 = vmatprep.subr.mxu0 0.0
    %1256 = vmatpush2.xpose.msra.mxu0 0.0
    %1257 = vmatprep.subr.mxu0 0.0
    %1258 = vmatpush2.xpose.msra.mxu0 0.0
    %1259 = vmatprep.subr.mxu0 0.0
    %1260 = vmatpush2.xpose.msra.mxu0 0.0
    %1261 = vmatprep.subr.mxu0 0.0
    %1262 = vmatpush2.xpose.msra.mxu0 0.0
    %1263 = vmatprep.subr.mxu0 0.0
    %1264 = vmatpush2.xpose.msra.mxu0 0.0
    %1265 = vmatprep.subr.mxu0 0.0
    %1266 = vmatpush2.xpose.msra.mxu0 0.0
    %1267 = vmatprep.mubr.f32.mxu0 0.0
    %1268 = vmatmul.mubr.f32.gmra.mxu0 %v1199
    %v1269 = vpop.f32.mrf.mxu0
    %v1270 = vadd.f32 0.0, %v1269
    %v1271 = vpop.f32.mrf.mxu0
    %1272 = vdwg.mxu0
    %1274 = vrot.lane.b32.xlu0 %v1270, 8
    %v1275 = vpop.permute.xlu0 %1274
    %v1277 = vsel %vm239, %v1275, -1e+09
    %v1278 = vsel %vm925, %v1277, -inf
    %1279 = vmax.xlane.f32.xlu0 %v1278
    %v1280 = vpop.xlane.xlu0 %1279
    %v1281 = vsub.f32 %v1277, %v1280
    %v1282 = vmul.f32 %v1281, 1.442695
    %v1283 = vpow.pop %v1282
    %1285 = vrot.lane.b32.xlu0 %v1283, 120
    %v1286 = vpop.permute.xlu0 %1285
    %v1288 = vsel %vm158, %v1286, 0.0
    %1289 = vadd.xlane.f32.xlu0 %v1288
    %v1290 = vpop.xlane.xlu0 %1289
    %v1291 = vrcp.pop %v1290
    %v1292 = vmul.f32 %v1283, %v1291
    %1294 = vrot.lane.b32.xlu0 %v1292, 120
    %v1295 = vpop.permute.xlu0 %1294
    %1296 = vrot.lane.b32.xlu0 %v152, 48
    %v1297 = vpop.permute.xlu0 %1296
    %v1299 = vsel %vm158, %v1295, 0
    %1301 = vmatprep.subr.mxu0 0.0
    %1302 = vmatpush1.msra.mxu0 0.0
    %1303 = vmatprep.subr.mxu0 0.0
    %1304 = vmatpush1.msra.mxu0 0.0
    %1305 = vmatprep.subr.mxu0 0.0
    %1306 = vmatpush1.msra.mxu0 0.0
    %1307 = vmatprep.subr.mxu0 0.0
    %1308 = vmatpush1.msra.mxu0 0.0
    %1309 = vmatprep.subr.mxu0 0.0
    %1310 = vmatpush1.msra.mxu0 0.0
    %1311 = vmatprep.subr.mxu0 0.0
    %1312 = vmatpush1.msra.mxu0 0.0
    %1313 = vmatprep.subr.mxu0 0.0
    %1314 = vmatpush1.msra.mxu0 0.0
    %1315 = vmatprep.subr.mxu0 0.0
    %1316 = vmatpush1.msra.mxu0 0.0
    %1317 = vmatprep.subr.mxu0 0.0
    %1318 = vmatpush1.msra.mxu0 0.0
    %1319 = vmatprep.subr.mxu0 0.0
    %1320 = vmatpush1.msra.mxu0 0.0
    %1321 = vmatprep.subr.mxu0 0.0
    %1322 = vmatpush1.msra.mxu0 0.0
    %1323 = vmatprep.subr.mxu0 0.0
    %1324 = vmatpush1.msra.mxu0 0.0
    %1325 = vmatprep.subr.mxu0 0.0
    %1326 = vmatpush1.msra.mxu0 0.0
    %1327 = vmatprep.subr.mxu0 0.0
    %1328 = vmatpush1.msra.mxu0 0.0
    %1329 = vmatprep.subr.mxu0 0.0
    %1330 = vmatpush1.msra.mxu0 0.0
    %1331 = vmatprep.subr.mxu0 0.0
    %1332 = vmatpush1.msra.mxu0 %v1297
    %1333 = vmatprep.subr.mxu0 0.0
    %1334 = vmatpush2.msra.mxu0 0.0
    %1335 = vmatprep.subr.mxu0 0.0
    %1336 = vmatpush2.msra.mxu0 0.0
    %1337 = vmatprep.subr.mxu0 0.0
    %1338 = vmatpush2.msra.mxu0 0.0
    %1339 = vmatprep.subr.mxu0 0.0
    %1340 = vmatpush2.msra.mxu0 0.0
    %1341 = vmatprep.subr.mxu0 0.0
    %1342 = vmatpush2.msra.mxu0 0.0
    %1343 = vmatprep.subr.mxu0 0.0
    %1344 = vmatpush2.msra.mxu0 0.0
    %1345 = vmatprep.subr.mxu0 0.0
    %1346 = vmatpush2.msra.mxu0 0.0
    %1347 = vmatprep.subr.mxu0 0.0
    %1348 = vmatpush2.msra.mxu0 0.0
    %1349 = vmatprep.subr.mxu0 0.0
    %1350 = vmatpush2.msra.mxu0 0.0
    %1351 = vmatprep.subr.mxu0 0.0
    %1352 = vmatpush2.msra.mxu0 0.0
    %1353 = vmatprep.subr.mxu0 0.0
    %1354 = vmatpush2.msra.mxu0 0.0
    %1355 = vmatprep.subr.mxu0 0.0
    %1356 = vmatpush2.msra.mxu0 0.0
    %1357 = vmatprep.subr.mxu0 0.0
    %1358 = vmatpush2.msra.mxu0 0.0
    %1359 = vmatprep.subr.mxu0 0.0
    %1360 = vmatpush2.msra.mxu0 0.0
    %1361 = vmatprep.subr.mxu0 0.0
    %1362 = vmatpush2.msra.mxu0 0.0
    %1363 = vmatprep.subr.mxu0 0.0
    %1364 = vmatpush2.msra.mxu0 0.0
    %1365 = vmatprep.mubr.f32.mxu0 0.0
    %1366 = vmatmul.mubr.f32.gmra.mxu0 %v1299
    %v1367 = vpop.f32.mrf.mxu0
    %v1368 = vadd.f32 0.0, %v1367
    %v1369 = vpop.f32.mrf.mxu0
    %1370 = vdwg.mxu0
    %1371 = vrot.lane.b32.xlu0 %v152, 104
    %v1372 = vpop.permute.xlu0 %1371
    %1373 = vrot.lane.b32.xlu0 %v152, 72
    %v1374 = vpop.permute.xlu0 %1373
    %v1375 = vsel %vm158, %v1372, 0
    %v1377 = vsel %vm158, %v1374, 0
    %1379 = vmatprep.subr.mxu0 0.0
    %1380 = vmatpush1.xpose.msra.mxu0 0.0
    %1381 = vmatprep.subr.mxu0 0.0
    %1382 = vmatpush1.xpose.msra.mxu0 0.0
    %1383 = vmatprep.subr.mxu0 0.0
    %1384 = vmatpush1.xpose.msra.mxu0 0.0
    %1385 = vmatprep.subr.mxu0 0.0
    %1386 = vmatpush1.xpose.msra.mxu0 0.0
    %1387 = vmatprep.subr.mxu0 0.0
    %1388 = vmatpush1.xpose.msra.mxu0 0.0
    %1389 = vmatprep.subr.mxu0 0.0
    %1390 = vmatpush1.xpose.msra.mxu0 0.0
    %1391 = vmatprep.subr.mxu0 0.0
    %1392 = vmatpush1.xpose.msra.mxu0 0.0
    %1393 = vmatprep.subr.mxu0 0.0
    %1394 = vmatpush1.xpose.msra.mxu0 0.0
    %1395 = vmatprep.subr.mxu0 0.0
    %1396 = vmatpush1.xpose.msra.mxu0 0.0
    %1397 = vmatprep.subr.mxu0 0.0
    %1398 = vmatpush1.xpose.msra.mxu0 0.0
    %1399 = vmatprep.subr.mxu0 0.0
    %1400 = vmatpush1.xpose.msra.mxu0 0.0
    %1401 = vmatprep.subr.mxu0 0.0
    %1402 = vmatpush1.xpose.msra.mxu0 0.0
    %1403 = vmatprep.subr.mxu0 0.0
    %1404 = vmatpush1.xpose.msra.mxu0 0.0
    %1405 = vmatprep.subr.mxu0 0.0
    %1406 = vmatpush1.xpose.msra.mxu0 0.0
    %1407 = vmatprep.subr.mxu0 0.0
    %1408 = vmatpush1.xpose.msra.mxu0 0.0
    %1409 = vmatprep.subr.mxu0 0.0
    %1410 = vmatpush1.xpose.msra.mxu0 %v1377
    %1411 = vmatprep.subr.mxu0 0.0
    %1412 = vmatpush2.xpose.msra.mxu0 0.0
    %1413 = vmatprep.subr.mxu0 0.0
    %1414 = vmatpush2.xpose.msra.mxu0 0.0
    %1415 = vmatprep.subr.mxu0 0.0
    %1416 = vmatpush2.xpose.msra.mxu0 0.0
    %1417 = vmatprep.subr.mxu0 0.0
    %1418 = vmatpush2.xpose.msra.mxu0 0.0
    %1419 = vmatprep.subr.mxu0 0.0
    %1420 = vmatpush2.xpose.msra.mxu0 0.0
    %1421 = vmatprep.subr.mxu0 0.0
    %1422 = vmatpush2.xpose.msra.mxu0 0.0
    %1423 = vmatprep.subr.mxu0 0.0
    %1424 = vmatpush2.xpose.msra.mxu0 0.0
    %1425 = vmatprep.subr.mxu0 0.0
    %1426 = vmatpush2.xpose.msra.mxu0 0.0
    %1427 = vmatprep.subr.mxu0 0.0
    %1428 = vmatpush2.xpose.msra.mxu0 0.0
    %1429 = vmatprep.subr.mxu0 0.0
    %1430 = vmatpush2.xpose.msra.mxu0 0.0
    %1431 = vmatprep.subr.mxu0 0.0
    %1432 = vmatpush2.xpose.msra.mxu0 0.0
    %1433 = vmatprep.subr.mxu0 0.0
    %1434 = vmatpush2.xpose.msra.mxu0 0.0
    %1435 = vmatprep.subr.mxu0 0.0
    %1436 = vmatpush2.xpose.msra.mxu0 0.0
    %1437 = vmatprep.subr.mxu0 0.0
    %1438 = vmatpush2.xpose.msra.mxu0 0.0
    %1439 = vmatprep.subr.mxu0 0.0
    %1440 = vmatpush2.xpose.msra.mxu0 0.0
    %1441 = vmatprep.subr.mxu0 0.0
    %1442 = vmatpush2.xpose.msra.mxu0 0.0
    %1443 = vmatprep.mubr.f32.mxu0 0.0
    %1444 = vmatmul.mubr.f32.gmra.mxu0 %v1375
    %v1445 = vpop.f32.mrf.mxu0
    %v1446 = vadd.f32 0.0, %v1445
    %v1447 = vpop.f32.mrf.mxu0
    %1448 = vdwg.mxu0
    %1450 = vrot.lane.b32.xlu0 %v1446, 8
    %v1451 = vpop.permute.xlu0 %1450
    %v1453 = vsel %vm239, %v1451, -1e+09
    %v1454 = vsel %vm925, %v1453, -inf
    %1455 = vmax.xlane.f32.xlu0 %v1454
    %v1456 = vpop.xlane.xlu0 %1455
    %v1457 = vsub.f32 %v1453, %v1456
    %v1458 = vmul.f32 %v1457, 1.442695
    %v1459 = vpow.pop %v1458
    %1461 = vrot.lane.b32.xlu0 %v1459, 120
    %v1462 = vpop.permute.xlu0 %1461
    %v1464 = vsel %vm158, %v1462, 0.0
    %1465 = vadd.xlane.f32.xlu0 %v1464
    %v1466 = vpop.xlane.xlu0 %1465
    %v1467 = vrcp.pop %v1466
    %v1468 = vmul.f32 %v1459, %v1467
    %1470 = vrot.lane.b32.xlu0 %v1468, 120
    %v1471 = vpop.permute.xlu0 %1470
    %1472 = vrot.lane.b32.xlu0 %v152, 40
    %v1473 = vpop.permute.xlu0 %1472
    %v1475 = vsel %vm158, %v1471, 0
    %1477 = vmatprep.subr.mxu0 0.0
    %1478 = vmatpush1.msra.mxu0 0.0
    %1479 = vmatprep.subr.mxu0 0.0
    %1480 = vmatpush1.msra.mxu0 0.0
    %1481 = vmatprep.subr.mxu0 0.0
    %1482 = vmatpush1.msra.mxu0 0.0
    %1483 = vmatprep.subr.mxu0 0.0
    %1484 = vmatpush1.msra.mxu0 0.0
    %1485 = vmatprep.subr.mxu0 0.0
    %1486 = vmatpush1.msra.mxu0 0.0
    %1487 = vmatprep.subr.mxu0 0.0
    %1488 = vmatpush1.msra.mxu0 0.0
    %1489 = vmatprep.subr.mxu0 0.0
    %1490 = vmatpush1.msra.mxu0 0.0
    %1491 = vmatprep.subr.mxu0 0.0
    %1492 = vmatpush1.msra.mxu0 0.0
    %1493 = vmatprep.subr.mxu0 0.0
    %1494 = vmatpush1.msra.mxu0 0.0
    %1495 = vmatprep.subr.mxu0 0.0
    %1496 = vmatpush1.msra.mxu0 0.0
    %1497 = vmatprep.subr.mxu0 0.0
    %1498 = vmatpush1.msra.mxu0 0.0
    %1499 = vmatprep.subr.mxu0 0.0
    %1500 = vmatpush1.msra.mxu0 0.0
    %1501 = vmatprep.subr.mxu0 0.0
    %1502 = vmatpush1.msra.mxu0 0.0
    %1503 = vmatprep.subr.mxu0 0.0
    %1504 = vmatpush1.msra.mxu0 0.0
    %1505 = vmatprep.subr.mxu0 0.0
    %1506 = vmatpush1.msra.mxu0 0.0
    %1507 = vmatprep.subr.mxu0 0.0
    %1508 = vmatpush1.msra.mxu0 %v1473
    %1509 = vmatprep.subr.mxu0 0.0
    %1510 = vmatpush2.msra.mxu0 0.0
    %1511 = vmatprep.subr.mxu0 0.0
    %1512 = vmatpush2.msra.mxu0 0.0
    %1513 = vmatprep.subr.mxu0 0.0
    %1514 = vmatpush2.msra.mxu0 0.0
    %1515 = vmatprep.subr.mxu0 0.0
    %1516 = vmatpush2.msra.mxu0 0.0
    %1517 = vmatprep.subr.mxu0 0.0
    %1518 = vmatpush2.msra.mxu0 0.0
    %1519 = vmatprep.subr.mxu0 0.0
    %1520 = vmatpush2.msra.mxu0 0.0
    %1521 = vmatprep.subr.mxu0 0.0
    %1522 = vmatpush2.msra.mxu0 0.0
    %1523 = vmatprep.subr.mxu0 0.0
    %1524 = vmatpush2.msra.mxu0 0.0
    %1525 = vmatprep.subr.mxu0 0.0
    %1526 = vmatpush2.msra.mxu0 0.0
    %1527 = vmatprep.subr.mxu0 0.0
    %1528 = vmatpush2.msra.mxu0 0.0
    %1529 = vmatprep.subr.mxu0 0.0
    %1530 = vmatpush2.msra.mxu0 0.0
    %1531 = vmatprep.subr.mxu0 0.0
    %1532 = vmatpush2.msra.mxu0 0.0
    %1533 = vmatprep.subr.mxu0 0.0
    %1534 = vmatpush2.msra.mxu0 0.0
    %1535 = vmatprep.subr.mxu0 0.0
    %1536 = vmatpush2.msra.mxu0 0.0
    %1537 = vmatprep.subr.mxu0 0.0
    %1538 = vmatpush2.msra.mxu0 0.0
    %1539 = vmatprep.subr.mxu0 0.0
    %1540 = vmatpush2.msra.mxu0 0.0
    %1541 = vmatprep.mubr.f32.mxu0 0.0
    %1542 = vmatmul.mubr.f32.gmra.mxu0 %v1475
    %v1543 = vpop.f32.mrf.mxu0
    %v1544 = vadd.f32 0.0, %v1543
    %v1545 = vpop.f32.mrf.mxu0
    %1546 = vdwg.mxu0
    %1548 = vrot.lane.b32.xlu0 %v1192, 8
    %v1549 = vpop.permute.xlu0 %1548
    %1552 = vrot.lane.b32.xlu0 %v1368, 16
    %v1553 = vpop.permute.xlu0 %1552
    %1556 = vrot.lane.b32.xlu0 %v1544, 24
    %v1557 = vpop.permute.xlu0 %1556
    %v1559 = vsel %vm158, %v1016, %v1549
    %v1560 = vsel %vm839, %v1559, %v1553
    %v1561 = vsel %vm841, %v1560, %v1557
    %v1562 = vld [vmem:[%s2] sm:$0xff]
    %v1563 = vld [vmem:[%s2 + $0x8] sm:$0xff]
    %v1564 = vld [vmem:[%s2 + $0x10] sm:$0xff]
    %v1565 = vld [vmem:[%s2 + $0x18] sm:$0xff]
    %v1566 = vlaneseq
    %v1567 = vshrl.u32 %v1566, 7
    %v1568 = vsub.s32 0, %v1567
    %v1569 = vrot.slane %v56, %v1568
    %v1571 = vsel %vm73, %v842, 0
    %v1574 = vsel %vm73, %v1561, 0
    %1576 = vmatprep.subr.mxu0 0.0
    %1577 = vmatpush1.msra.mxu0 0.0
    %1578 = vmatprep.subr.mxu0 0.0
    %1579 = vmatpush1.msra.mxu0 0.0
    %1580 = vmatprep.subr.mxu0 0.0
    %1581 = vmatpush1.msra.mxu0 0.0
    %1582 = vmatprep.subr.mxu0 0.0
    %1583 = vmatpush1.msra.mxu0 0.0
    %1584 = vmatprep.subr.mxu0 0.0
    %1585 = vmatpush1.msra.mxu0 0.0
    %1586 = vmatprep.subr.mxu0 0.0
    %1587 = vmatpush1.msra.mxu0 0.0
    %1588 = vmatprep.subr.mxu0 0.0
    %1589 = vmatpush1.msra.mxu0 0.0
    %1590 = vmatprep.subr.mxu0 0.0
    %1591 = vmatpush1.msra.mxu0 0.0
    %1592 = vmatprep.subr.mxu0 0.0
    %1593 = vmatpush1.msra.mxu0 0.0
    %1594 = vmatprep.subr.mxu0 0.0
    %1595 = vmatpush1.msra.mxu0 0.0
    %1596 = vmatprep.subr.mxu0 0.0
    %1597 = vmatpush1.msra.mxu0 0.0
    %1598 = vmatprep.subr.mxu0 0.0
    %1599 = vmatpush1.msra.mxu0 0.0
    %1600 = vmatprep.subr.mxu0 0.0
    %1601 = vmatpush1.msra.mxu0 %v1565
    %1602 = vmatprep.subr.mxu0 0.0
    %1603 = vmatpush1.msra.mxu0 %v1564
    %1604 = vmatprep.subr.mxu0 0.0
    %1605 = vmatpush1.msra.mxu0 %v1563
    %1606 = vmatprep.subr.mxu0 0.0
    %1607 = vmatpush1.msra.mxu0 %v1562
    %1608 = vmatprep.subr.mxu0 0.0
    %1609 = vmatpush2.msra.mxu0 0.0
    %1610 = vmatprep.subr.mxu0 0.0
    %1611 = vmatpush2.msra.mxu0 0.0
    %1612 = vmatprep.subr.mxu0 0.0
    %1613 = vmatpush2.msra.mxu0 0.0
    %1614 = vmatprep.subr.mxu0 0.0
    %1615 = vmatpush2.msra.mxu0 0.0
    %1616 = vmatprep.subr.mxu0 0.0
    %1617 = vmatpush2.msra.mxu0 0.0
    %1618 = vmatprep.subr.mxu0 0.0
    %1619 = vmatpush2.msra.mxu0 0.0
    %1620 = vmatprep.subr.mxu0 0.0
    %1621 = vmatpush2.msra.mxu0 0.0
    %1622 = vmatprep.subr.mxu0 0.0
    %1623 = vmatpush2.msra.mxu0 0.0
    %1624 = vmatprep.subr.mxu0 0.0
    %1625 = vmatpush2.msra.mxu0 0.0
    %1626 = vmatprep.subr.mxu0 0.0
    %1627 = vmatpush2.msra.mxu0 0.0
    %1628 = vmatprep.subr.mxu0 0.0
    %1629 = vmatpush2.msra.mxu0 0.0
    %1630 = vmatprep.subr.mxu0 0.0
    %1631 = vmatpush2.msra.mxu0 0.0
    %1632 = vmatprep.subr.mxu0 0.0
    %1633 = vmatpush2.msra.mxu0 0.0
    %1634 = vmatprep.subr.mxu0 0.0
    %1635 = vmatpush2.msra.mxu0 0.0
    %1636 = vmatprep.subr.mxu0 0.0
    %1637 = vmatpush2.msra.mxu0 0.0
    %1638 = vmatprep.subr.mxu0 0.0
    %1639 = vmatpush2.msra.mxu0 0.0
    %1640 = vmatprep.mubr.f32.mxu0 0.0
    %1641 = vmatmul.mubr.f32.gmra.mxu0 %v1571
    %v1642 = vpop.f32.mrf.mxu0
    %v1643 = vadd.f32 %v1569, %v1642
    %v1644 = vpop.f32.mrf.mxu0
    %1645 = vmatprep.mubr.f32.mxu0 0.0
    %1646 = vmatmul.mubr.f32.gmra.mxu0 %v1574
    %v1647 = vpop.f32.mrf.mxu0
    %v1648 = vadd.f32 %v1569, %v1647
    %v1649 = vpop.f32.mrf.mxu0
    %1650 = vdwg.mxu0
    %v1651 = vadd.f32 %v52, %v1643
    %v1652 = vadd.f32 %v53, %v1648
    %v1653 = vsel %vm73, %v1651, 0.0
    %1654 = vadd.xlane.f32.xlu0 %v1653
    %v1655 = vpop.xlane.xlu0 %1654
    %v1656 = vsel %vm73, %v1652, 0.0
    %1657 = vadd.xlane.f32.xlu0 %v1656
    %v1658 = vpop.xlane.xlu0 %1657
    %v1659 = vrcp.pop 32.0
    %v1660 = vmul.f32 %v1655, %v1659
    %v1661 = vmul.f32 %v1658, %v1659
    %v1662 = vsub.f32 %v1651, %v1660
    %v1663 = vsub.f32 %v1652, %v1661
    %v1664 = vmul.f32 %v1662, %v1662
    %v1665 = vmul.f32 %v1663, %v1663
    %v1666 = vsel %vm73, %v1664, 0.0
    %1667 = vadd.xlane.f32.xlu0 %v1666
    %v1668 = vpop.xlane.xlu0 %1667
    %v1669 = vsel %vm73, %v1665, 0.0
    %1670 = vadd.xlane.f32.xlu0 %v1669
    %v1671 = vpop.xlane.xlu0 %1670
    %v1672 = vmul.f32 %v1668, %v1659
    %v1673 = vmul.f32 %v1671, %v1659
    %v1674 = vadd.f32 %v1672, 1e-12
    %v1675 = vadd.f32 %v1673, 1e-12
    %v1676 = vrsqrt.pop %v1674
    %v1677 = vrsqrt.pop %v1675
    %v1678 = vmul.f32 %v1662, %v1676
    %v1679 = vmul.f32 %v1663, %v1677
    %v1680 = vlaneseq
    %v1681 = vshrl.u32 %v1680, 7
    %v1682 = vsub.s32 0, %v1681
    %v1683 = vrot.slane %v57, %v1682
    %v1684 = vmul.f32 %v1678, %v1683
    %v1685 = vmul.f32 %v1679, %v1683
    %v1686 = vlaneseq
    %v1687 = vshrl.u32 %v1686, 7
    %v1688 = vsub.s32 0, %v1687
    %v1689 = vrot.slane %v58, %v1688
    %v1690 = vadd.f32 %v1684, %v1689
    %v1691 = vadd.f32 %v1685, %v1689
    %v1692 = vld [vmem:[%s3] sm:$0xff]
    %v1693 = vld [vmem:[%s3 + $0x8] sm:$0xff]
    %v1694 = vld [vmem:[%s3 + $0x10] sm:$0xff]
    %v1695 = vld [vmem:[%s3 + $0x18] sm:$0xff]
    %v1696 = vlaneseq
    %v1697 = vshrl.u32 %v1696, 7
    %v1698 = vsub.s32 0, %v1697
    %v1699 = vrot.slane %v55, %v1698
    %v1701 = vsel %vm73, %v1690, 0
    %v1704 = vsel %vm73, %v1691, 0
    %1706 = vmatprep.subr.mxu0 0.0
    %1707 = vmatpush1.msra.mxu0 0.0
    %1708 = vmatprep.subr.mxu0 0.0
    %1709 = vmatpush1.msra.mxu0 0.0
    %1710 = vmatprep.subr.mxu0 0.0
    %1711 = vmatpush1.msra.mxu0 0.0
    %1712 = vmatprep.subr.mxu0 0.0
    %1713 = vmatpush1.msra.mxu0 0.0
    %1714 = vmatprep.subr.mxu0 0.0
    %1715 = vmatpush1.msra.mxu0 0.0
    %1716 = vmatprep.subr.mxu0 0.0
    %1717 = vmatpush1.msra.mxu0 0.0
    %1718 = vmatprep.subr.mxu0 0.0
    %1719 = vmatpush1.msra.mxu0 0.0
    %1720 = vmatprep.subr.mxu0 0.0
    %1721 = vmatpush1.msra.mxu0 0.0
    %1722 = vmatprep.subr.mxu0 0.0
    %1723 = vmatpush1.msra.mxu0 0.0
    %1724 = vmatprep.subr.mxu0 0.0
    %1725 = vmatpush1.msra.mxu0 0.0
    %1726 = vmatprep.subr.mxu0 0.0
    %1727 = vmatpush1.msra.mxu0 0.0
    %1728 = vmatprep.subr.mxu0 0.0
    %1729 = vmatpush1.msra.mxu0 0.0
    %1730 = vmatprep.subr.mxu0 0.0
    %1731 = vmatpush1.msra.mxu0 %v1695
    %1732 = vmatprep.subr.mxu0 0.0
    %1733 = vmatpush1.msra.mxu0 %v1694
    %1734 = vmatprep.subr.mxu0 0.0
    %1735 = vmatpush1.msra.mxu0 %v1693
    %1736 = vmatprep.subr.mxu0 0.0
    %1737 = vmatpush1.msra.mxu0 %v1692
    %1738 = vmatprep.subr.mxu0 0.0
    %1739 = vmatpush2.msra.mxu0 0.0
    %1740 = vmatprep.subr.mxu0 0.0
    %1741 = vmatpush2.msra.mxu0 0.0
    %1742 = vmatprep.subr.mxu0 0.0
    %1743 = vmatpush2.msra.mxu0 0.0
    %1744 = vmatprep.subr.mxu0 0.0
    %1745 = vmatpush2.msra.mxu0 0.0
    %1746 = vmatprep.subr.mxu0 0.0
    %1747 = vmatpush2.msra.mxu0 0.0
    %1748 = vmatprep.subr.mxu0 0.0
    %1749 = vmatpush2.msra.mxu0 0.0
    %1750 = vmatprep.subr.mxu0 0.0
    %1751 = vmatpush2.msra.mxu0 0.0
    %1752 = vmatprep.subr.mxu0 0.0
    %1753 = vmatpush2.msra.mxu0 0.0
    %1754 = vmatprep.subr.mxu0 0.0
    %1755 = vmatpush2.msra.mxu0 0.0
    %1756 = vmatprep.subr.mxu0 0.0
    %1757 = vmatpush2.msra.mxu0 0.0
    %1758 = vmatprep.subr.mxu0 0.0
    %1759 = vmatpush2.msra.mxu0 0.0
    %1760 = vmatprep.subr.mxu0 0.0
    %1761 = vmatpush2.msra.mxu0 0.0
    %1762 = vmatprep.subr.mxu0 0.0
    %1763 = vmatpush2.msra.mxu0 0.0
    %1764 = vmatprep.subr.mxu0 0.0
    %1765 = vmatpush2.msra.mxu0 0.0
    %1766 = vmatprep.subr.mxu0 0.0
    %1767 = vmatpush2.msra.mxu0 0.0
    %1768 = vmatprep.subr.mxu0 0.0
    %1769 = vmatpush2.msra.mxu0 0.0
    %1770 = vmatprep.mubr.f32.mxu0 0.0
    %1771 = vmatmul.mubr.f32.gmra.mxu0 %v1701
    %v1772 = vpop.f32.mrf.mxu0
    %v1773 = vadd.f32 %v1699, %v1772
    %v1774 = vpop.f32.mrf.mxu0
    %1775 = vmatprep.mubr.f32.mxu0 0.0
    %1776 = vmatmul.mubr.f32.gmra.mxu0 %v1704
    %v1777 = vpop.f32.mrf.mxu0
    %v1778 = vadd.f32 %v1699, %v1777
    %v1779 = vpop.f32.mrf.mxu0
    %1780 = vdwg.mxu0
    %v1781 = vmul.f32 %v1773, %v1773
    %v1782 = vmul.f32 %v1778, %v1778
    %v1783 = vmul.f32 %v1773, %v1781
    %v1784 = vmul.f32 %v1778, %v1782
    %v1785 = vmul.f32 %v1783, 0.044715
    %v1786 = vmul.f32 %v1784, 0.044715
    %v1787 = vadd.f32 %v1773, %v1785
    %v1788 = vadd.f32 %v1778, %v1786
    %v1789 = vmul.f32 %v1787, 0.7978846
    %v1790 = vmul.f32 %v1788, 0.7978846
    %v1791 = vtanh.pop %v1789
    %v1792 = vtanh.pop %v1790
    %v1793 = vadd.f32 %v1791, 1.0
    %v1794 = vadd.f32 %v1792, 1.0
    %v1795 = vmul.f32 %v1793, 0.5
    %v1796 = vmul.f32 %v1794, 0.5
    %v1797 = vmul.f32 %v1773, %v1795
    %v1798 = vmul.f32 %v1778, %v1796
    %v1799 = vld [vmem:[%s4] sm:$0xff]
    %v1800 = vld [vmem:[%s4 + $0x8] sm:$0xff]
    %v1801 = vld [vmem:[%s4 + $0x10] sm:$0xff]
    %v1802 = vld [vmem:[%s4 + $0x18] sm:$0xff]
    %v1803 = vld [vmem:[%s4 + $0x20] sm:$0xff]
    %v1804 = vld [vmem:[%s4 + $0x28] sm:$0xff]
    %v1805 = vld [vmem:[%s4 + $0x30] sm:$0xff]
    %v1806 = vld [vmem:[%s4 + $0x38] sm:$0xff]
    %vm1807 = vcmask 523264
    %v1809 = vsel %vm1807, %v1797, 0
    %v1812 = vsel %vm1807, %v1798, 0
    %1814 = vmatprep.subr.mxu0 0.0
    %1815 = vmatpush1.msra.mxu0 0.0
    %1816 = vmatprep.subr.mxu0 0.0
    %1817 = vmatpush1.msra.mxu0 0.0
    %1818 = vmatprep.subr.mxu0 0.0
    %1819 = vmatpush1.msra.mxu0 0.0
    %1820 = vmatprep.subr.mxu0 0.0
    %1821 = vmatpush1.msra.mxu0 0.0
    %1822 = vmatprep.subr.mxu0 0.0
    %1823 = vmatpush1.msra.mxu0 0.0
    %1824 = vmatprep.subr.mxu0 0.0
    %1825 = vmatpush1.msra.mxu0 0.0
    %1826 = vmatprep.subr.mxu0 0.0
    %1827 = vmatpush1.msra.mxu0 0.0
    %1828 = vmatprep.subr.mxu0 0.0
    %1829 = vmatpush1.msra.mxu0 0.0
    %1830 = vmatprep.subr.mxu0 0.0
    %1831 = vmatpush1.msra.mxu0 %v1806
    %1832 = vmatprep.subr.mxu0 0.0
    %1833 = vmatpush1.msra.mxu0 %v1805
    %1834 = vmatprep.subr.mxu0 0.0
    %1835 = vmatpush1.msra.mxu0 %v1804
    %1836 = vmatprep.subr.mxu0 0.0
    %1837 = vmatpush1.msra.mxu0 %v1803
    %1838 = vmatprep.subr.mxu0 0.0
    %1839 = vmatpush1.msra.mxu0 %v1802
    %1840 = vmatprep.subr.mxu0 0.0
    %1841 = vmatpush1.msra.mxu0 %v1801
    %1842 = vmatprep.subr.mxu0 0.0
    %1843 = vmatpush1.msra.mxu0 %v1800
    %1844 = vmatprep.subr.mxu0 0.0
    %1845 = vmatpush1.msra.mxu0 %v1799
    %1846 = vmatprep.subr.mxu0 0.0
    %1847 = vmatpush2.msra.mxu0 0.0
    %1848 = vmatprep.subr.mxu0 0.0
    %1849 = vmatpush2.msra.mxu0 0.0
    %1850 = vmatprep.subr.mxu0 0.0
    %1851 = vmatpush2.msra.mxu0 0.0
    %1852 = vmatprep.subr.mxu0 0.0
    %1853 = vmatpush2.msra.mxu0 0.0
    %1854 = vmatprep.subr.mxu0 0.0
    %1855 = vmatpush2.msra.mxu0 0.0
    %1856 = vmatprep.subr.mxu0 0.0
    %1857 = vmatpush2.msra.mxu0 0.0
    %1858 = vmatprep.subr.mxu0 0.0
    %1859 = vmatpush2.msra.mxu0 0.0
    %1860 = vmatprep.subr.mxu0 0.0
    %1861 = vmatpush2.msra.mxu0 0.0
    %1862 = vmatprep.subr.mxu0 0.0
    %1863 = vmatpush2.msra.mxu0 0.0
    %1864 = vmatprep.subr.mxu0 0.0
    %1865 = vmatpush2.msra.mxu0 0.0
    %1866 = vmatprep.subr.mxu0 0.0
    %1867 = vmatpush2.msra.mxu0 0.0
    %1868 = vmatprep.subr.mxu0 0.0
    %1869 = vmatpush2.msra.mxu0 0.0
    %1870 = vmatprep.subr.mxu0 0.0
    %1871 = vmatpush2.msra.mxu0 0.0
    %1872 = vmatprep.subr.mxu0 0.0
    %1873 = vmatpush2.msra.mxu0 0.0
    %1874 = vmatprep.subr.mxu0 0.0
    %1875 = vmatpush2.msra.mxu0 0.0
    %1876 = vmatprep.subr.mxu0 0.0
    %1877 = vmatpush2.msra.mxu0 0.0
    %1878 = vmatprep.mubr.f32.mxu0 0.0
    %1879 = vmatmul.mubr.f32.gmra.mxu0 %v1809
    %v1880 = vpop.f32.mrf.mxu0
    %v1881 = vadd.f32 0.0, %v1880
    %v1882 = vpop.f32.mrf.mxu0
    %1883 = vmatprep.mubr.f32.mxu0 0.0
    %1884 = vmatmul.mubr.f32.gmra.mxu0 %v1812
    %v1885 = vpop.f32.mrf.mxu0
    %v1886 = vadd.f32 0.0, %v1885
    %v1887 = vpop.f32.mrf.mxu0
    %1888 = vdwg.mxu0
    %v1889 = vadd.f32 %v1690, %v1881
    %v1890 = vadd.f32 %v1691, %v1886
    %v1891 = vlaneseq
    %v1892 = vshrl.u32 %v1891, 7
    %v1893 = vsub.s32 0, %v1892
    %v1894 = vrot.slane %v59, %v1893
    %v1895 = vadd.f32 %v1889, %v1894
    %v1896 = vadd.f32 %v1890, %v1894
    %v1897 = vsel %vm73, %v1895, 0.0
    %1898 = vadd.xlane.f32.xlu0 %v1897
    %v1899 = vpop.xlane.xlu0 %1898
    %v1900 = vsel %vm73, %v1896, 0.0
    %1901 = vadd.xlane.f32.xlu0 %v1900
    %v1902 = vpop.xlane.xlu0 %1901
    %v1903 = vmul.f32 %v1899, %v1659
    %v1904 = vmul.f32 %v1902, %v1659
    %v1905 = vsub.f32 %v1895, %v1903
    %v1906 = vsub.f32 %v1896, %v1904
    %v1907 = vmul.f32 %v1905, %v1905
    %v1908 = vmul.f32 %v1906, %v1906
    %v1909 = vsel %vm73, %v1907, 0.0
    %1910 = vadd.xlane.f32.xlu0 %v1909
    %v1911 = vpop.xlane.xlu0 %1910
    %v1912 = vsel %vm73, %v1908, 0.0
    %1913 = vadd.xlane.f32.xlu0 %v1912
    %v1914 = vpop.xlane.xlu0 %1913
    %v1915 = vmul.f32 %v1911, %v1659
    %v1916 = vmul.f32 %v1914, %v1659
    %v1917 = vadd.f32 %v1915, 1e-12
    %v1918 = vadd.f32 %v1916, 1e-12
    %v1919 = vrsqrt.pop %v1917
    %v1920 = vrsqrt.pop %v1918
    %v1921 = vmul.f32 %v1905, %v1919
    %v1922 = vmul.f32 %v1906, %v1920
    %v1923 = vlaneseq
    %v1924 = vshrl.u32 %v1923, 7
    %v1925 = vsub.s32 0, %v1924
    %v1926 = vrot.slane %v60, %v1925
    %v1927 = vmul.f32 %v1921, %v1926
    %v1928 = vmul.f32 %v1922, %v1926
    %v1929 = vlaneseq
    %v1930 = vshrl.u32 %v1929, 7
    %v1931 = vsub.s32 0, %v1930
    %v1932 = vrot.slane %v61, %v1931
    %v1933 = vadd.f32 %v1927, %v1932
    %v1934 = vadd.f32 %v1928, %v1932
    %1936 = vset.pattern.permute.xlu0 0
    %1937 = vperm.xlu0 %1936, %v63
    %v1938 = vpop.permute.xlu0 %1937
    %v1941 = vsel %vm73, %v62, 0
    %v1944 = vsel %vm73, %v1933, 0
    %v1947 = vsel %vm73, %v1934, 0
    %1949 = vmatprep.subr.mxu0 0.0
    %1950 = vmatpush1.xpose.msra.mxu0 0.0
    %1951 = vmatprep.subr.mxu0 0.0
    %1952 = vmatpush1.xpose.msra.mxu0 0.0
    %1953 = vmatprep.subr.mxu0 0.0
    %1954 = vmatpush1.xpose.msra.mxu0 0.0
    %1955 = vmatprep.subr.mxu0 0.0
    %1956 = vmatpush1.xpose.msra.mxu0 0.0
    %1957 = vmatprep.subr.mxu0 0.0
    %1958 = vmatpush1.xpose.msra.mxu0 0.0
    %1959 = vmatprep.subr.mxu0 0.0
    %1960 = vmatpush1.xpose.msra.mxu0 0.0
    %1961 = vmatprep.subr.mxu0 0.0
    %1962 = vmatpush1.xpose.msra.mxu0 0.0
    %1963 = vmatprep.subr.mxu0 0.0
    %1964 = vmatpush1.xpose.msra.mxu0 0.0
    %1965 = vmatprep.subr.mxu0 0.0
    %1966 = vmatpush1.xpose.msra.mxu0 0.0
    %1967 = vmatprep.subr.mxu0 0.0
    %1968 = vmatpush1.xpose.msra.mxu0 0.0
    %1969 = vmatprep.subr.mxu0 0.0
    %1970 = vmatpush1.xpose.msra.mxu0 0.0
    %1971 = vmatprep.subr.mxu0 0.0
    %1972 = vmatpush1.xpose.msra.mxu0 0.0
    %1973 = vmatprep.subr.mxu0 0.0
    %1974 = vmatpush1.xpose.msra.mxu0 0.0
    %1975 = vmatprep.subr.mxu0 0.0
    %1976 = vmatpush1.xpose.msra.mxu0 0.0
    %1977 = vmatprep.subr.mxu0 0.0
    %1978 = vmatpush1.xpose.msra.mxu0 %v1947
    %1979 = vmatprep.subr.mxu0 0.0
    %1980 = vmatpush1.xpose.msra.mxu0 %v1944
    %1981 = vmatprep.subr.mxu0 0.0
    %1982 = vmatpush2.xpose.msra.mxu0 0.0
    %1983 = vmatprep.subr.mxu0 0.0
    %1984 = vmatpush2.xpose.msra.mxu0 0.0
    %1985 = vmatprep.subr.mxu0 0.0
    %1986 = vmatpush2.xpose.msra.mxu0 0.0
    %1987 = vmatprep.subr.mxu0 0.0
    %1988 = vmatpush2.xpose.msra.mxu0 0.0
    %1989 = vmatprep.subr.mxu0 0.0
    %1990 = vmatpush2.xpose.msra.mxu0 0.0
    %1991 = vmatprep.subr.mxu0 0.0
    %1992 = vmatpush2.xpose.msra.mxu0 0.0
    %1993 = vmatprep.subr.mxu0 0.0
    %1994 = vmatpush2.xpose.msra.mxu0 0.0
    %1995 = vmatprep.subr.mxu0 0.0
    %1996 = vmatpush2.xpose.msra.mxu0 0.0
    %1997 = vmatprep.subr.mxu0 0.0
    %1998 = vmatpush2.xpose.msra.mxu0 0.0
    %1999 = vmatprep.subr.mxu0 0.0
    %2000 = vmatpush2.xpose.msra.mxu0 0.0
    %2001 = vmatprep.subr.mxu0 0.0
    %2002 = vmatpush2.xpose.msra.mxu0 0.0
    %2003 = vmatprep.subr.mxu0 0.0
    %2004 = vmatpush2.xpose.msra.mxu0 0.0
    %2005 = vmatprep.subr.mxu0 0.0
    %2006 = vmatpush2.xpose.msra.mxu0 0.0
    %2007 = vmatprep.subr.mxu0 0.0
    %2008 = vmatpush2.xpose.msra.mxu0 0.0
    %2009 = vmatprep.subr.mxu0 0.0
    %2010 = vmatpush2.xpose.msra.mxu0 0.0
    %2011 = vmatprep.subr.mxu0 0.0
    %2012 = vmatpush2.xpose.msra.mxu0 0.0
    %2013 = vmatprep.mubr.f32.mxu0 0.0
    %2014 = vmatmul.mubr.f32.gmra.mxu0 %v1941
    %v2015 = vpop.f32.mrf.mxu0
    %v2016 = vadd.f32 %v1938, %v2015
    %v2017 = vpop.f32.mrf.mxu0
    %2018 = vdwg.mxu0
    %v2019 = vsel %vm839, %v2016, 0.0
    %2020 = vst [vmem:[#allocation7] sm:$0x1] %v2019
    // Predicated region
    $region34: #{tpu_custom_call.1} parent=1 // pred_check
      _
    $region35: #{tpu_custom_call.1} parent=1 // pred_check_branch
      %2022 = sbr.rel (0) target = $region37
    $region36: #{tpu_custom_call.1} parent=1 // pred_region
      %s2024 = ssub.s32 16, 16
      %2025 = vsyncadd [#allocation4], %s2024
      %s2027 = sshll.u32 [#allocation7], 4
      %s2028 = int_to_ptr.vmem [resolvable:$true] %s2027
      %2030 = dma.vmem_to_hbm [thread:$0]  %s2028, 16, %s6, [#allocation4]
    $region37: #{tpu_custom_call.1} parent=1 // pred_fallthru
      _
    // Predicated region
    $region38: #{tpu_custom_call.1} parent=1 // pred_check
      _
    $region39: #{tpu_custom_call.1} parent=1 // pred_check_branch
      %2032 = sbr.rel (0) target = $region41
    $region40: #{tpu_custom_call.1} parent=1 // pred_region
      %2033 = dma.done [#allocation4], 16
    $region41: #{tpu_custom_call.1} parent=1 // pred_fallthru
      _
    %2034 = vsyncpa [#allocation3], 1
    %2035 = vsyncpa [#allocation6], 1
    %2036 = vsyncpa [#allocation4], 1

</llo_original>
